<compile_context>
chip_gen: v7x
topology: tpu7x:2x2x1
jax: 0.10.0
libtpu: 0.0.40
codegen_flags: <defaults>
</compile_context>

<pallas_src>
import functools

import jax
import jax.numpy as jnp
import numpy as np
from jax import lax
from jax.experimental import pallas as pl
from jax.experimental.pallas import tpu as pltpu


def _adaptive_bins(in_size, out_size):
  """PyTorch AdaptiveAvgPool bin boundaries (static python ints)."""
  bins = []
  for i in range(out_size):
    start = (i * in_size) // out_size
    end = -(-((i + 1) * in_size) // out_size)  # ceil
    bins.append((start, end))
  return bins


def _sigmoid(z):
  # exp lands on the EUP slot; exact divide keeps numerics within the 1e-4
  # check (pl.reciprocal(approx=True) is too coarse for that tolerance).
  return 1.0 / (1.0 + jnp.exp(-z))


def _build_tap_masks(H, W, k, p):
  """(2k, H*W) f32 0/1 masks for the rolled depthwise taps.

  Row t   (t in [0,k)): 1 where the (1,k) conv tap reads inside the row,
                        i.e. 0 <= w + (t - p) < W for output position (h, w).
  Row k+s (s in [0,k)): 1 where the (k,1) conv tap reads inside the image,
                        i.e. 0 <= flat + (s - p)*W < H*W.
  """
  HW = H * W
  M = np.zeros((2 * k, HW), np.float32)
  for t in range(k):
    d = t - p
    for h in range(H):
      for w in range(W):
        if 0 <= w + d < W:
          M[t, h * W + w] = 1.0
  for s in range(k):
    d = (s - p) * W
    for fl in range(HW):
      if 0 <= fl + d < HW:
        M[k + s, fl] = 1.0
  return M


def _build_pool_matrix(H, W, Ho, Wo, pool_out):
  """(H*W, pool_out**2) f32: AdaptiveAvgPool2d as a single matmul.

  Only positions inside the valid (Ho, Wo) conv-output region contribute; the
  flat grid keeps row stride W, out-of-range lanes get weight 0 (so the bogus
  depthwise values computed at w >= Wo / h >= Ho never leak into the result).
  """
  HW = H * W
  G = pool_out * pool_out
  P = np.zeros((HW, G), np.float32)
  hb = _adaptive_bins(Ho, pool_out)
  wb = _adaptive_bins(Wo, pool_out)
  for gi, (h0, h1) in enumerate(hb):
    for gj, (w0, w1) in enumerate(wb):
      inv = 1.0 / float((h1 - h0) * (w1 - w0))
      for h in range(h0, h1):
        for w in range(w0, w1):
          P[h * W + w, gi * pool_out + gj] = inv
  return P


def _const_spec(shape):
  """Full-array BlockSpec for an input whose block index never changes."""
  idx = lambda *_: (0,) * len(shape)
  try:
    # Single buffer: double-buffering a never-changing block is VMEM waste.
    return pl.BlockSpec(shape, idx, pipeline_mode=pl.Buffered(1))
  except (AttributeError, TypeError):   # older jax without pipeline_mode
    return pl.BlockSpec(shape, idx)


def spatial_sep_kernel(x_ref, w_exp_ref, dw_ref, mask_ref, bn_shift_ref,
                       pool_ref, w_se1_ref, b_se1_ref, w_se2_ref, b_se2_ref,
                       w_pw_ref, o_ref, *, k, p, W):
  """B_blk batch elements per grid step; working layout is (rows, flat-spatial)."""
  B_blk, C_in, HW = x_ref.shape
  C_mid = w_exp_ref.shape[0]
  n_out = o_ref.shape[1]
  BC = B_blk * C_mid

  x = x_ref[...]                 # (B_blk, C_in, HW)
  w_exp = w_exp_ref[...]         # (C_mid, C_in)

  # ---- expand: C_in broadcast-FMAs on the VPU (C_in is tiny) ----
  y3 = x[:, 0:1, :] * w_exp[:, 0:1]            # (B_blk, C_mid, HW)
  for c in range(1, C_in):
    y3 = y3 + x[:, c:c + 1, :] * w_exp[:, c:c + 1]
  # Leading-dim collapse (free: C_mid is a multiple of 8).
  y = y3.reshape(BC, HW)                       # (B_blk*C_mid, HW)

  dw = dw_ref[...]               # (BC, 2k) per-row tap weights (loaded once)
  masks = mask_ref[...]          # (2k, HW) 0/1 boundary masks (loaded once)

  def dwconv(yv, col0, unit):
    # Depthwise conv as k x (roll + mask + per-row FMA); unit = 1 for the
    # (1,k) conv along W, unit = W for the (k,1) conv along H.
    acc = None
    for i in range(k):
      col = col0 + i
      d = (i - p) * unit
      v = yv if d == 0 else pltpu.roll(yv, (-d) % HW, axis=1)
      if d != 0:
        v = v * masks[col:col + 1, :]          # zero the wrapped-around lanes
      v = v * dw[:, col:col + 1]               # per-channel tap weight
      acc = v if acc is None else acc + v
    return acc

  y = dwconv(y, 0, 1)            # depthwise (1, k) along W
  y = dwconv(y, k, W)            # depthwise (k, 1) along H (bn_scale folded)

  # ---- BatchNorm shift (scale already folded into taps) + SiLU ----
  y = y + bn_shift_ref[...]
  y = y * _sigmoid(y)

  # ---- SE branch (replaces x, per the reference forward) ----
  pooled = jnp.dot(y, pool_ref[...], preferred_element_type=jnp.float32)     # (BC, G)
  se = jnp.dot(w_se1_ref[...], pooled,
               preferred_element_type=jnp.float32) + b_se1_ref[...]          # (B*red, G)
  se = se * _sigmoid(se)
  se = jnp.dot(w_se2_ref[...], se,
               preferred_element_type=jnp.float32) + b_se2_ref[...]          # (BC, G)
  se = _sigmoid(se)

  # ---- pointwise 1x1 conv (block-diagonal over the stacked batch) ----
  out = jnp.dot(w_pw_ref[...], se, preferred_element_type=jnp.float32)       # (B*n_out, G)
  o_ref[...] = out.reshape(B_blk, n_out, out.shape[-1])


def spatial_separable_block_pallas(x_nchw, params, *, n_out, kernel_size=6,
                                   stride=1, pool_out=4, skip_connection=False,
                                   block_batch=None):
  assert stride == 1, "TODO(synk): stride > 1 not implemented"
  N, C_in, H, W = x_nchw.shape
  HW = H * W
  G = pool_out * pool_out
  C_mid = params["w_exp"].shape[1]
  reduced = params["w_se1"].shape[1]
  k = kernel_size
  p = (k - 1) // 2
  Ho = H + 2 * p - k + 1
  Wo = W + 2 * p - k + 1
  f32 = jnp.float32

  # Batch tiling: stack B_blk samples per step (fills the matmul M dimension,
  # amortizes per-step overhead) while keeping >= 2 grid steps when N >= 2 so
  # both TensorCores on dual-core parts get work.
  if block_batch is None:
    block_batch = max(1, min(8, pl.cdiv(N, 2)))
  B_blk = int(min(block_batch, N))
  grid_n = int(pl.cdiv(N, B_blk))
  N_pad = grid_n * B_blk
  BC = B_blk * C_mid
  R = B_blk * reduced

  x = x_nchw.reshape(N, C_in, HW).astype(f32)   # channels-leading, flat spatial
  if N_pad != N:
    x = jnp.pad(x, ((0, N_pad - N), (0, 0), (0, 0)))

  # Host-built static constants (tiny; O(HW), no O(HW^2) shift matrices).
  masks = jnp.asarray(_build_tap_masks(H, W, k, p))                   # (2k, HW)
  pool_mat = jnp.asarray(_build_pool_matrix(H, W, Ho, Wo, pool_out))  # (HW, G)

  # Per-row tap weights on the stacked (B_blk*C_mid) row space; bn_scale folded
  # into the (k,1) taps.  Columns [0,k) = (1,k) taps, [k,2k) = (k,1) taps.
  w1k_t = params["w1k"].astype(f32).T                                  # (C_mid, k)
  wk1_t = (params["wk1"] * params["bn_scale"][None, :]).astype(f32).T  # (C_mid, k)
  dw = jnp.tile(jnp.concatenate([w1k_t, wk1_t], axis=1), (B_blk, 1))   # (BC, 2k)
  bn_shift = jnp.tile(params["bn_shift"].astype(f32), B_blk).reshape(BC, 1)

  # Block-diagonal channel-mixing weights so the SE / pointwise matmuls run on
  # the stacked row space in one shot (M = B_blk*C_mid instead of C_mid).
  eye = jnp.eye(B_blk, dtype=f32)
  w_exp = params["w_exp"].T.astype(f32)                                # (C_mid, C_in)
  w_se1 = jnp.kron(eye, params["w_se1"].T.astype(f32))                 # (R, BC)
  w_se2 = jnp.kron(eye, params["w_se2"].T.astype(f32))                 # (BC, R)
  w_pw = jnp.kron(eye, params["w_pw"].T.astype(f32))                   # (B_blk*n_out, BC)
  b_se1 = jnp.tile(params["b_se1"].astype(f32), B_blk).reshape(R, 1)
  b_se2 = jnp.tile(params["b_se2"].astype(f32), B_blk).reshape(BC, 1)

  kernel = functools.partial(spatial_sep_kernel, k=k, p=p, W=W)

  out_pad = pl.pallas_call(
      kernel,
      out_shape=jax.ShapeDtypeStruct((N_pad, n_out, G), f32),
      grid=(grid_n,),
      in_specs=[
          pl.BlockSpec((B_blk, C_in, HW), lambda b: (b, 0, 0)),
          _const_spec((C_mid, C_in)),
          _const_spec((BC, 2 * k)),
          _const_spec((2 * k, HW)),
          _const_spec((BC, 1)),
          _const_spec((HW, G)),
          _const_spec((R, BC)),
          _const_spec((R, 1)),
          _const_spec((BC, R)),
          _const_spec((BC, 1)),
          _const_spec((B_blk * n_out, BC)),
      ],
      out_specs=pl.BlockSpec((B_blk, n_out, G), lambda b: (b, 0, 0)),
      compiler_params=pltpu.CompilerParams(
          dimension_semantics=("parallel",)),
  )(x, w_exp, dw, masks, bn_shift, pool_mat, w_se1, b_se1, w_se2, b_se2, w_pw)

  out = out_pad[:N].reshape(N, n_out, pool_out, pool_out)   # free reshape in XLA
  if skip_connection:
    # eval-mode Dropout2d is identity; the residual is only shape-valid when
    # the output spatial size equals the input's and n_in == n_out.
    assert out.shape == x_nchw.shape, (
        f"skip_connection requires matching shapes ({x_nchw.shape} vs {out.shape})")
    out = out + x_nchw.astype(out.dtype)
  return out


# ---------------------- pure-JAX reference (for checking) ----------------------
def _adaptive_avg_pool_nchw(x, out_size):
  _, _, H, W = x.shape
  hb, wb = _adaptive_bins(H, out_size), _adaptive_bins(W, out_size)
  rows = []
  for (hs, he) in hb:
    cols = [jnp.mean(x[:, :, hs:he, ws:we], axis=(2, 3)) for (ws, we) in wb]
    rows.append(jnp.stack(cols, axis=-1))
  return jnp.stack(rows, axis=-2)  # (N, C, out, out)


def reference_forward(x, p, *, kernel_size, stride, pool_out,
                      skip_connection=False):
  k = kernel_size
  pad = (k - 1) // 2
  C_mid = p["w_exp"].shape[1]
  dn = ("NCHW", "OIHW", "NCHW")
  y = lax.conv_general_dilated(
      x, p["w_exp"].T.reshape(C_mid, -1, 1, 1), (1, 1), ((0, 0), (0, 0)),
      dimension_numbers=dn)
  y = lax.conv_general_dilated(
      y, p["w1k"].T.reshape(C_mid, 1, 1, k), (1, stride),
      ((0, 0), (pad, pad)), dimension_numbers=dn, feature_group_count=C_mid)
  y = lax.conv_general_dilated(
      y, p["wk1"].T.reshape(C_mid, 1, k, 1), (stride, 1),
      ((pad, pad), (0, 0)), dimension_numbers=dn, feature_group_count=C_mid)
  y = y * p["bn_scale"][None, :, None, None] + p["bn_shift"][None, :, None, None]
  y = y * jax.nn.sigmoid(y)
  y = _adaptive_avg_pool_nchw(y, pool_out)
  se = jnp.einsum("nchw,cr->nrhw", y, p["w_se1"]) + p["b_se1"][None, :, None, None]
  se = se * jax.nn.sigmoid(se)
  se = jnp.einsum("nrhw,rc->nchw", se, p["w_se2"]) + p["b_se2"][None, :, None, None]
  se = jax.nn.sigmoid(se)
  out = jnp.einsum("nchw,co->nohw", se, p["w_pw"])
  if skip_connection:
    out = out + x
  return out


if __name__ == "__main__":
  # Small deterministic config: n_in != n_out so skip_connection is False
  # (matching the PyTorch module logic: stride == 1 and n_in == n_out).
  batch, n_in, n_out = 2, 4, 8
  H = W = 16
  kernel_size, stride, expansion, reduction = 6, 1, 6, 4
  C_mid = int(n_in * expansion)                  # 24
  reduced = max(1, int(n_in // reduction))       # 1
  skip_connection = (stride == 1 and n_in == n_out)

  key = jax.random.PRNGKey(0)
  ks = jax.random.split(key, 13)
  f32 = jnp.float32
  gamma = 1.0 + 0.1 * jax.random.normal(ks[3], (C_mid,), f32)
  beta = 0.1 * jax.random.normal(ks[4], (C_mid,), f32)
  rmean = 0.1 * jax.random.normal(ks[5], (C_mid,), f32)
  rvar = jax.random.uniform(ks[6], (C_mid,), f32, minval=0.5, maxval=1.5)
  bn_scale = gamma * lax.rsqrt(rvar + 1e-5)
  bn_shift = beta - rmean * bn_scale

  params = {
      "w_exp": 0.1 * jax.random.normal(ks[0], (n_in, C_mid), f32),
      "w1k": 0.1 * jax.random.normal(ks[1], (kernel_size, C_mid), f32),
      "wk1": 0.1 * jax.random.normal(ks[2], (kernel_size, C_mid), f32),
      "bn_scale": bn_scale,
      "bn_shift": bn_shift,
      "w_se1": 0.1 * jax.random.normal(ks[7], (C_mid, reduced), f32),
      "b_se1": 0.1 * jax.random.normal(ks[8], (reduced,), f32),
      "w_se2": 0.1 * jax.random.normal(ks[9], (reduced, C_mid), f32),
      "b_se2": 0.1 * jax.random.normal(ks[10], (C_mid,), f32),
      "w_pw": 0.1 * jax.random.normal(ks[11], (C_mid, n_out), f32),
  }

  x = jax.random.normal(ks[12], (batch, n_in, H, W), f32)   # NCHW input

  out = spatial_separable_block_pallas(
      x, params, n_out=n_out, kernel_size=kernel_size, stride=stride,
      pool_out=4, skip_connection=skip_connection)
  out = jax.block_until_ready(out)

  ref = reference_forward(x, params, kernel_size=kernel_size, stride=stride,
                          pool_out=4, skip_connection=skip_connection)
  ref = jax.block_until_ready(ref)

  assert out.shape == (batch, n_out, 4, 4), out.shape
  np.testing.assert_allclose(np.asarray(out), np.asarray(ref),
                             rtol=1e-4, atol=1e-4)
  print("KERNEL_OK")
</pallas_src>

<mosaic_0001>
module attributes {stable_mosaic.version = 11 : i64} {
  func.func @spatial_sep_kernel(%arg0: i32, %arg1: memref<1x4x256xf32, #tpu.memory_space<vmem>>, %arg2: memref<24x4xf32, #tpu.memory_space<vmem>>, %arg3: memref<24x12xf32, #tpu.memory_space<vmem>>, %arg4: memref<12x256xf32, #tpu.memory_space<vmem>>, %arg5: memref<24x1xf32, #tpu.memory_space<vmem>>, %arg6: memref<256x16xf32, #tpu.memory_space<vmem>>, %arg7: memref<1x24xf32, #tpu.memory_space<vmem>>, %arg8: memref<1x1xf32, #tpu.memory_space<vmem>>, %arg9: memref<24x1xf32, #tpu.memory_space<vmem>>, %arg10: memref<24x1xf32, #tpu.memory_space<vmem>>, %arg11: memref<8x24xf32, #tpu.memory_space<vmem>>, %arg12: memref<1x8x16xf32, #tpu.memory_space<vmem>>) attributes {dimension_semantics = [#tpu.dimension_semantics<parallel>], iteration_bounds = array<i64: 2>, scalar_prefetch = 0 : i64, scratch_operands = 0 : i64, tpu.core_type = #tpu.core_type<tc>, window_params = [{transform_indices = @transform_0, window_bounds = array<i64: 1, 4, 256>}, {pipeline_mode = #tpu.pipeline_mode<synchronous>, transform_indices = @transform_1, window_bounds = array<i64: 24, 4>}, {pipeline_mode = #tpu.pipeline_mode<synchronous>, transform_indices = @transform_2, window_bounds = array<i64: 24, 12>}, {pipeline_mode = #tpu.pipeline_mode<synchronous>, transform_indices = @transform_3, window_bounds = array<i64: 12, 256>}, {pipeline_mode = #tpu.pipeline_mode<synchronous>, transform_indices = @transform_4, window_bounds = array<i64: 24, 1>}, {pipeline_mode = #tpu.pipeline_mode<synchronous>, transform_indices = @transform_5, window_bounds = array<i64: 256, 16>}, {pipeline_mode = #tpu.pipeline_mode<synchronous>, transform_indices = @transform_6, window_bounds = array<i64: 1, 24>}, {pipeline_mode = #tpu.pipeline_mode<synchronous>, transform_indices = @transform_7, window_bounds = array<i64: 1, 1>}, {pipeline_mode = #tpu.pipeline_mode<synchronous>, transform_indices = @transform_8, window_bounds = array<i64: 24, 1>}, {pipeline_mode = #tpu.pipeline_mode<synchronous>, transform_indices = @transform_9, window_bounds = array<i64: 24, 1>}, {pipeline_mode = #tpu.pipeline_mode<synchronous>, transform_indices = @transform_10, window_bounds = array<i64: 8, 24>}, {transform_indices = @transform_11, window_bounds = array<i64: 1, 8, 16>}]} {
    %c0 = arith.constant 0 : index
    %c0_0 = arith.constant 0 : index
    %c0_1 = arith.constant 0 : index
    %0 = vector.load %arg1[%c0, %c0_0, %c0_1] : memref<1x4x256xf32, #tpu.memory_space<vmem>>, vector<1x4x256xf32>
    %c0_2 = arith.constant 0 : index
    %c0_3 = arith.constant 0 : index
    %1 = vector.load %arg2[%c0_2, %c0_3] : memref<24x4xf32, #tpu.memory_space<vmem>>, vector<24x4xf32>
    %2 = vector.extract_strided_slice %0 {offsets = [0, 0, 0], sizes = [1, 1, 256], strides = [1, 1, 1]} : vector<1x4x256xf32> to vector<1x1x256xf32>
    %3 = vector.extract_strided_slice %1 {offsets = [0, 0], sizes = [24, 1], strides = [1, 1]} : vector<24x4xf32> to vector<24x1xf32>
    %4 = vector.shape_cast %3 : vector<24x1xf32> to vector<1x24x1xf32>
    %5 = vector.broadcast %2 : vector<1x1x256xf32> to vector<1x24x256xf32>
    %6 = vector.broadcast %4 : vector<1x24x1xf32> to vector<1x24x256xf32>
    %7 = arith.mulf %5, %6 : vector<1x24x256xf32>
    %8 = vector.extract_strided_slice %0 {offsets = [0, 1, 0], sizes = [1, 1, 256], strides = [1, 1, 1]} : vector<1x4x256xf32> to vector<1x1x256xf32>
    %9 = vector.extract_strided_slice %1 {offsets = [0, 1], sizes = [24, 1], strides = [1, 1]} : vector<24x4xf32> to vector<24x1xf32>
    %10 = vector.shape_cast %9 : vector<24x1xf32> to vector<1x24x1xf32>
    %11 = vector.broadcast %8 : vector<1x1x256xf32> to vector<1x24x256xf32>
    %12 = vector.broadcast %10 : vector<1x24x1xf32> to vector<1x24x256xf32>
    %13 = arith.mulf %11, %12 : vector<1x24x256xf32>
    %14 = arith.addf %7, %13 : vector<1x24x256xf32>
    %15 = vector.extract_strided_slice %0 {offsets = [0, 2, 0], sizes = [1, 1, 256], strides = [1, 1, 1]} : vector<1x4x256xf32> to vector<1x1x256xf32>
    %16 = vector.extract_strided_slice %1 {offsets = [0, 2], sizes = [24, 1], strides = [1, 1]} : vector<24x4xf32> to vector<24x1xf32>
    %17 = vector.shape_cast %16 : vector<24x1xf32> to vector<1x24x1xf32>
    %18 = vector.broadcast %15 : vector<1x1x256xf32> to vector<1x24x256xf32>
    %19 = vector.broadcast %17 : vector<1x24x1xf32> to vector<1x24x256xf32>
    %20 = arith.mulf %18, %19 : vector<1x24x256xf32>
    %21 = arith.addf %14, %20 : vector<1x24x256xf32>
    %22 = vector.extract_strided_slice %0 {offsets = [0, 3, 0], sizes = [1, 1, 256], strides = [1, 1, 1]} : vector<1x4x256xf32> to vector<1x1x256xf32>
    %23 = vector.extract_strided_slice %1 {offsets = [0, 3], sizes = [24, 1], strides = [1, 1]} : vector<24x4xf32> to vector<24x1xf32>
    %24 = vector.shape_cast %23 : vector<24x1xf32> to vector<1x24x1xf32>
    %25 = vector.broadcast %22 : vector<1x1x256xf32> to vector<1x24x256xf32>
    %26 = vector.broadcast %24 : vector<1x24x1xf32> to vector<1x24x256xf32>
    %27 = arith.mulf %25, %26 : vector<1x24x256xf32>
    %28 = arith.addf %21, %27 : vector<1x24x256xf32>
    %29 = vector.shape_cast %28 : vector<1x24x256xf32> to vector<24x256xf32>
    %c0_4 = arith.constant 0 : index
    %c0_5 = arith.constant 0 : index
    %30 = vector.load %arg3[%c0_4, %c0_5] : memref<24x12xf32, #tpu.memory_space<vmem>>, vector<24x12xf32>
    %c0_6 = arith.constant 0 : index
    %c0_7 = arith.constant 0 : index
    %31 = vector.load %arg4[%c0_6, %c0_7] : memref<12x256xf32, #tpu.memory_space<vmem>>, vector<12x256xf32>
    %c2_i32 = arith.constant 2 : i32
    %32 = tpu.dynamic_rotate %29 by %c2_i32 dim 1 : vector<24x256xf32>, i32 -> vector<24x256xf32>
    %33 = vector.extract_strided_slice %31 {offsets = [0, 0], sizes = [1, 256], strides = [1, 1]} : vector<12x256xf32> to vector<1x256xf32>
    %34 = vector.broadcast %33 : vector<1x256xf32> to vector<24x256xf32>
    %35 = arith.mulf %32, %34 : vector<24x256xf32>
    %36 = vector.extract_strided_slice %30 {offsets = [0, 0], sizes = [24, 1], strides = [1, 1]} : vector<24x12xf32> to vector<24x1xf32>
    %37 = vector.broadcast %36 : vector<24x1xf32> to vector<24x256xf32>
    %38 = arith.mulf %35, %37 : vector<24x256xf32>
    %c1_i32 = arith.constant 1 : i32
    %39 = tpu.dynamic_rotate %29 by %c1_i32 dim 1 : vector<24x256xf32>, i32 -> vector<24x256xf32>
    %40 = vector.extract_strided_slice %31 {offsets = [1, 0], sizes = [1, 256], strides = [1, 1]} : vector<12x256xf32> to vector<1x256xf32>
    %41 = vector.broadcast %40 : vector<1x256xf32> to vector<24x256xf32>
    %42 = arith.mulf %39, %41 : vector<24x256xf32>
    %43 = vector.extract_strided_slice %30 {offsets = [0, 1], sizes = [24, 1], strides = [1, 1]} : vector<24x12xf32> to vector<24x1xf32>
    %44 = vector.broadcast %43 : vector<24x1xf32> to vector<24x256xf32>
    %45 = arith.mulf %42, %44 : vector<24x256xf32>
    %46 = arith.addf %38, %45 : vector<24x256xf32>
    %47 = vector.extract_strided_slice %30 {offsets = [0, 2], sizes = [24, 1], strides = [1, 1]} : vector<24x12xf32> to vector<24x1xf32>
    %48 = vector.broadcast %47 : vector<24x1xf32> to vector<24x256xf32>
    %49 = arith.mulf %29, %48 : vector<24x256xf32>
    %50 = arith.addf %46, %49 : vector<24x256xf32>
    %c255_i32 = arith.constant 255 : i32
    %51 = tpu.dynamic_rotate %29 by %c255_i32 dim 1 : vector<24x256xf32>, i32 -> vector<24x256xf32>
    %52 = vector.extract_strided_slice %31 {offsets = [3, 0], sizes = [1, 256], strides = [1, 1]} : vector<12x256xf32> to vector<1x256xf32>
    %53 = vector.broadcast %52 : vector<1x256xf32> to vector<24x256xf32>
    %54 = arith.mulf %51, %53 : vector<24x256xf32>
    %55 = vector.extract_strided_slice %30 {offsets = [0, 3], sizes = [24, 1], strides = [1, 1]} : vector<24x12xf32> to vector<24x1xf32>
    %56 = vector.broadcast %55 : vector<24x1xf32> to vector<24x256xf32>
    %57 = arith.mulf %54, %56 : vector<24x256xf32>
    %58 = arith.addf %50, %57 : vector<24x256xf32>
    %c254_i32 = arith.constant 254 : i32
    %59 = tpu.dynamic_rotate %29 by %c254_i32 dim 1 : vector<24x256xf32>, i32 -> vector<24x256xf32>
    %60 = vector.extract_strided_slice %31 {offsets = [4, 0], sizes = [1, 256], strides = [1, 1]} : vector<12x256xf32> to vector<1x256xf32>
    %61 = vector.broadcast %60 : vector<1x256xf32> to vector<24x256xf32>
    %62 = arith.mulf %59, %61 : vector<24x256xf32>
    %63 = vector.extract_strided_slice %30 {offsets = [0, 4], sizes = [24, 1], strides = [1, 1]} : vector<24x12xf32> to vector<24x1xf32>
    %64 = vector.broadcast %63 : vector<24x1xf32> to vector<24x256xf32>
    %65 = arith.mulf %62, %64 : vector<24x256xf32>
    %66 = arith.addf %58, %65 : vector<24x256xf32>
    %c253_i32 = arith.constant 253 : i32
    %67 = tpu.dynamic_rotate %29 by %c253_i32 dim 1 : vector<24x256xf32>, i32 -> vector<24x256xf32>
    %68 = vector.extract_strided_slice %31 {offsets = [5, 0], sizes = [1, 256], strides = [1, 1]} : vector<12x256xf32> to vector<1x256xf32>
    %69 = vector.broadcast %68 : vector<1x256xf32> to vector<24x256xf32>
    %70 = arith.mulf %67, %69 : vector<24x256xf32>
    %71 = vector.extract_strided_slice %30 {offsets = [0, 5], sizes = [24, 1], strides = [1, 1]} : vector<24x12xf32> to vector<24x1xf32>
    %72 = vector.broadcast %71 : vector<24x1xf32> to vector<24x256xf32>
    %73 = arith.mulf %70, %72 : vector<24x256xf32>
    %74 = arith.addf %66, %73 : vector<24x256xf32>
    %c32_i32 = arith.constant 32 : i32
    %75 = tpu.dynamic_rotate %74 by %c32_i32 dim 1 : vector<24x256xf32>, i32 -> vector<24x256xf32>
    %76 = vector.extract_strided_slice %31 {offsets = [6, 0], sizes = [1, 256], strides = [1, 1]} : vector<12x256xf32> to vector<1x256xf32>
    %77 = vector.broadcast %76 : vector<1x256xf32> to vector<24x256xf32>
    %78 = arith.mulf %75, %77 : vector<24x256xf32>
    %79 = vector.extract_strided_slice %30 {offsets = [0, 6], sizes = [24, 1], strides = [1, 1]} : vector<24x12xf32> to vector<24x1xf32>
    %80 = vector.broadcast %79 : vector<24x1xf32> to vector<24x256xf32>
    %81 = arith.mulf %78, %80 : vector<24x256xf32>
    %c16_i32 = arith.constant 16 : i32
    %82 = tpu.dynamic_rotate %74 by %c16_i32 dim 1 : vector<24x256xf32>, i32 -> vector<24x256xf32>
    %83 = vector.extract_strided_slice %31 {offsets = [7, 0], sizes = [1, 256], strides = [1, 1]} : vector<12x256xf32> to vector<1x256xf32>
    %84 = vector.broadcast %83 : vector<1x256xf32> to vector<24x256xf32>
    %85 = arith.mulf %82, %84 : vector<24x256xf32>
    %86 = vector.extract_strided_slice %30 {offsets = [0, 7], sizes = [24, 1], strides = [1, 1]} : vector<24x12xf32> to vector<24x1xf32>
    %87 = vector.broadcast %86 : vector<24x1xf32> to vector<24x256xf32>
    %88 = arith.mulf %85, %87 : vector<24x256xf32>
    %89 = arith.addf %81, %88 : vector<24x256xf32>
    %90 = vector.extract_strided_slice %30 {offsets = [0, 8], sizes = [24, 1], strides = [1, 1]} : vector<24x12xf32> to vector<24x1xf32>
    %91 = vector.broadcast %90 : vector<24x1xf32> to vector<24x256xf32>
    %92 = arith.mulf %74, %91 : vector<24x256xf32>
    %93 = arith.addf %89, %92 : vector<24x256xf32>
    %c240_i32 = arith.constant 240 : i32
    %94 = tpu.dynamic_rotate %74 by %c240_i32 dim 1 : vector<24x256xf32>, i32 -> vector<24x256xf32>
    %95 = vector.extract_strided_slice %31 {offsets = [9, 0], sizes = [1, 256], strides = [1, 1]} : vector<12x256xf32> to vector<1x256xf32>
    %96 = vector.broadcast %95 : vector<1x256xf32> to vector<24x256xf32>
    %97 = arith.mulf %94, %96 : vector<24x256xf32>
    %98 = vector.extract_strided_slice %30 {offsets = [0, 9], sizes = [24, 1], strides = [1, 1]} : vector<24x12xf32> to vector<24x1xf32>
    %99 = vector.broadcast %98 : vector<24x1xf32> to vector<24x256xf32>
    %100 = arith.mulf %97, %99 : vector<24x256xf32>
    %101 = arith.addf %93, %100 : vector<24x256xf32>
    %c224_i32 = arith.constant 224 : i32
    %102 = tpu.dynamic_rotate %74 by %c224_i32 dim 1 : vector<24x256xf32>, i32 -> vector<24x256xf32>
    %103 = vector.extract_strided_slice %31 {offsets = [10, 0], sizes = [1, 256], strides = [1, 1]} : vector<12x256xf32> to vector<1x256xf32>
    %104 = vector.broadcast %103 : vector<1x256xf32> to vector<24x256xf32>
    %105 = arith.mulf %102, %104 : vector<24x256xf32>
    %106 = vector.extract_strided_slice %30 {offsets = [0, 10], sizes = [24, 1], strides = [1, 1]} : vector<24x12xf32> to vector<24x1xf32>
    %107 = vector.broadcast %106 : vector<24x1xf32> to vector<24x256xf32>
    %108 = arith.mulf %105, %107 : vector<24x256xf32>
    %109 = arith.addf %101, %108 : vector<24x256xf32>
    %c208_i32 = arith.constant 208 : i32
    %110 = tpu.dynamic_rotate %74 by %c208_i32 dim 1 : vector<24x256xf32>, i32 -> vector<24x256xf32>
    %111 = vector.extract_strided_slice %31 {offsets = [11, 0], sizes = [1, 256], strides = [1, 1]} : vector<12x256xf32> to vector<1x256xf32>
    %112 = vector.broadcast %111 : vector<1x256xf32> to vector<24x256xf32>
    %113 = arith.mulf %110, %112 : vector<24x256xf32>
    %114 = vector.extract_strided_slice %30 {offsets = [0, 11], sizes = [24, 1], strides = [1, 1]} : vector<24x12xf32> to vector<24x1xf32>
    %115 = vector.broadcast %114 : vector<24x1xf32> to vector<24x256xf32>
    %116 = arith.mulf %113, %115 : vector<24x256xf32>
    %117 = arith.addf %109, %116 : vector<24x256xf32>
    %c0_8 = arith.constant 0 : index
    %c0_9 = arith.constant 0 : index
    %118 = vector.load %arg5[%c0_8, %c0_9] : memref<24x1xf32, #tpu.memory_space<vmem>>, vector<24x1xf32>
    %119 = vector.broadcast %118 : vector<24x1xf32> to vector<24x256xf32>
    %120 = arith.addf %117, %119 : vector<24x256xf32>
    %cst = arith.constant 0.000000e+00 : f32
    %121 = vector.broadcast %cst : f32 to vector<24x256xf32>
    %122 = arith.subf %121, %120 : vector<24x256xf32>
    %123 = math.exp %122 : vector<24x256xf32>
    %cst_10 = arith.constant 1.000000e+00 : f32
    %124 = vector.broadcast %cst_10 : f32 to vector<24x256xf32>
    %125 = arith.addf %124, %123 : vector<24x256xf32>
    %cst_11 = arith.constant 1.000000e+00 : f32
    %126 = vector.broadcast %cst_11 : f32 to vector<24x256xf32>
    %127 = arith.divf %126, %125 : vector<24x256xf32>
    %128 = arith.mulf %120, %127 : vector<24x256xf32>
    %c0_12 = arith.constant 0 : index
    %c0_13 = arith.constant 0 : index
    %129 = vector.load %arg6[%c0_12, %c0_13] : memref<256x16xf32, #tpu.memory_space<vmem>>, vector<256x16xf32>
    %cst_14 = arith.constant dense<0.000000e+00> : vector<24x16xf32>
    %130 = tpu.matmul %128, %129, %cst_14 {dimension_numbers = #tpu.dot_dimension_numbers<[1], [0], [0], [1], [0, 0, 1, 1], [], []>} : vector<24x256xf32>, vector<256x16xf32>, vector<24x16xf32> -> vector<24x16xf32>
    %c0_15 = arith.constant 0 : index
    %c0_16 = arith.constant 0 : index
    %131 = vector.load %arg7[%c0_15, %c0_16] : memref<1x24xf32, #tpu.memory_space<vmem>>, vector<1x24xf32>
    %cst_17 = arith.constant dense<0.000000e+00> : vector<1x16xf32>
    %132 = tpu.matmul %131, %130, %cst_17 {dimension_numbers = #tpu.dot_dimension_numbers<[1], [0], [0], [1], [0, 0, 1, 1], [], []>} : vector<1x24xf32>, vector<24x16xf32>, vector<1x16xf32> -> vector<1x16xf32>
    %c0_18 = arith.constant 0 : index
    %c0_19 = arith.constant 0 : index
    %133 = vector.load %arg8[%c0_18, %c0_19] : memref<1x1xf32, #tpu.memory_space<vmem>>, vector<1x1xf32>
    %134 = vector.broadcast %133 : vector<1x1xf32> to vector<1x16xf32>
    %135 = arith.addf %132, %134 : vector<1x16xf32>
    %cst_20 = arith.constant 0.000000e+00 : f32
    %136 = vector.broadcast %cst_20 : f32 to vector<1x16xf32>
    %137 = arith.subf %136, %135 : vector<1x16xf32>
    %138 = math.exp %137 : vector<1x16xf32>
    %cst_21 = arith.constant 1.000000e+00 : f32
    %139 = vector.broadcast %cst_21 : f32 to vector<1x16xf32>
    %140 = arith.addf %139, %138 : vector<1x16xf32>
    %cst_22 = arith.constant 1.000000e+00 : f32
    %141 = vector.broadcast %cst_22 : f32 to vector<1x16xf32>
    %142 = arith.divf %141, %140 : vector<1x16xf32>
    %143 = arith.mulf %135, %142 : vector<1x16xf32>
    %c0_23 = arith.constant 0 : index
    %c0_24 = arith.constant 0 : index
    %144 = vector.load %arg9[%c0_23, %c0_24] : memref<24x1xf32, #tpu.memory_space<vmem>>, vector<24x1xf32>
    %cst_25 = arith.constant dense<0.000000e+00> : vector<24x16xf32>
    %145 = tpu.matmul %144, %143, %cst_25 {dimension_numbers = #tpu.dot_dimension_numbers<[1], [0], [0], [1], [0, 0, 1, 1], [], []>} : vector<24x1xf32>, vector<1x16xf32>, vector<24x16xf32> -> vector<24x16xf32>
    %c0_26 = arith.constant 0 : index
    %c0_27 = arith.constant 0 : index
    %146 = vector.load %arg10[%c0_26, %c0_27] : memref<24x1xf32, #tpu.memory_space<vmem>>, vector<24x1xf32>
    %147 = vector.broadcast %146 : vector<24x1xf32> to vector<24x16xf32>
    %148 = arith.addf %145, %147 : vector<24x16xf32>
    %cst_28 = arith.constant 0.000000e+00 : f32
    %149 = vector.broadcast %cst_28 : f32 to vector<24x16xf32>
    %150 = arith.subf %149, %148 : vector<24x16xf32>
    %151 = math.exp %150 : vector<24x16xf32>
    %cst_29 = arith.constant 1.000000e+00 : f32
    %152 = vector.broadcast %cst_29 : f32 to vector<24x16xf32>
    %153 = arith.addf %152, %151 : vector<24x16xf32>
    %cst_30 = arith.constant 1.000000e+00 : f32
    %154 = vector.broadcast %cst_30 : f32 to vector<24x16xf32>
    %155 = arith.divf %154, %153 : vector<24x16xf32>
    %c0_31 = arith.constant 0 : index
    %c0_32 = arith.constant 0 : index
    %156 = vector.load %arg11[%c0_31, %c0_32] : memref<8x24xf32, #tpu.memory_space<vmem>>, vector<8x24xf32>
    %cst_33 = arith.constant dense<0.000000e+00> : vector<8x16xf32>
    %157 = tpu.matmul %156, %155, %cst_33 {dimension_numbers = #tpu.dot_dimension_numbers<[1], [0], [0], [1], [0, 0, 1, 1], [], []>} : vector<8x24xf32>, vector<24x16xf32>, vector<8x16xf32> -> vector<8x16xf32>
    %158 = vector.shape_cast %157 : vector<8x16xf32> to vector<1x8x16xf32>
    %c0_34 = arith.constant 0 : index
    %c0_35 = arith.constant 0 : index
    %c0_36 = arith.constant 0 : index
    %159 = vector.load %arg12[%c0_34, %c0_35, %c0_36] : memref<1x8x16xf32, #tpu.memory_space<vmem>>, vector<1x8x16xf32>
    tpu.vector_store %arg12[%c0_34, %c0_35, %c0_36], %158 {strides = array<i32>} : memref<1x8x16xf32, #tpu.memory_space<vmem>>, vector<1x8x16xf32>,
    return
  }
  func.func @transform_0(%arg0: i32) -> (i32, i32, i32) {
    %c0_i32 = arith.constant 0 : i32
    %c0_i32_0 = arith.constant 0 : i32
    %c0_i32_1 = arith.constant 0 : i32
    return %arg0, %c0_i32, %c0_i32_0 : i32, i32, i32
  }
  func.func @transform_1(%arg0: i32) -> (i32, i32) {
    %c0_i32 = arith.constant 0 : i32
    %c0_i32_0 = arith.constant 0 : i32
    %c0_i32_1 = arith.constant 0 : i32
    return %c0_i32, %c0_i32_0 : i32, i32
  }
  func.func @transform_2(%arg0: i32) -> (i32, i32) {
    %c0_i32 = arith.constant 0 : i32
    %c0_i32_0 = arith.constant 0 : i32
    %c0_i32_1 = arith.constant 0 : i32
    return %c0_i32, %c0_i32_0 : i32, i32
  }
  func.func @transform_3(%arg0: i32) -> (i32, i32) {
    %c0_i32 = arith.constant 0 : i32
    %c0_i32_0 = arith.constant 0 : i32
    %c0_i32_1 = arith.constant 0 : i32
    return %c0_i32, %c0_i32_0 : i32, i32
  }
  func.func @transform_4(%arg0: i32) -> (i32, i32) {
    %c0_i32 = arith.constant 0 : i32
    %c0_i32_0 = arith.constant 0 : i32
    %c0_i32_1 = arith.constant 0 : i32
    return %c0_i32, %c0_i32_0 : i32, i32
  }
  func.func @transform_5(%arg0: i32) -> (i32, i32) {
    %c0_i32 = arith.constant 0 : i32
    %c0_i32_0 = arith.constant 0 : i32
    %c0_i32_1 = arith.constant 0 : i32
    return %c0_i32, %c0_i32_0 : i32, i32
  }
  func.func @transform_6(%arg0: i32) -> (i32, i32) {
    %c0_i32 = arith.constant 0 : i32
    %c0_i32_0 = arith.constant 0 : i32
    %c0_i32_1 = arith.constant 0 : i32
    return %c0_i32, %c0_i32_0 : i32, i32
  }
  func.func @transform_7(%arg0: i32) -> (i32, i32) {
    %c0_i32 = arith.constant 0 : i32
    %c0_i32_0 = arith.constant 0 : i32
    %c0_i32_1 = arith.constant 0 : i32
    return %c0_i32, %c0_i32_0 : i32, i32
  }
  func.func @transform_8(%arg0: i32) -> (i32, i32) {
    %c0_i32 = arith.constant 0 : i32
    %c0_i32_0 = arith.constant 0 : i32
    %c0_i32_1 = arith.constant 0 : i32
    return %c0_i32, %c0_i32_0 : i32, i32
  }
  func.func @transform_9(%arg0: i32) -> (i32, i32) {
    %c0_i32 = arith.constant 0 : i32
    %c0_i32_0 = arith.constant 0 : i32
    %c0_i32_1 = arith.constant 0 : i32
    return %c0_i32, %c0_i32_0 : i32, i32
  }
  func.func @transform_10(%arg0: i32) -> (i32, i32) {
    %c0_i32 = arith.constant 0 : i32
    %c0_i32_0 = arith.constant 0 : i32
    %c0_i32_1 = arith.constant 0 : i32
    return %c0_i32, %c0_i32_0 : i32, i32
  }
  func.func @transform_11(%arg0: i32) -> (i32, i32, i32) {
    %c0_i32 = arith.constant 0 : i32
    %c0_i32_0 = arith.constant 0 : i32
    %c0_i32_1 = arith.constant 0 : i32
    return %arg0, %c0_i32, %c0_i32_0 : i32, i32, i32
  }
}

</mosaic_0001>

<llo_original>
// kernel: tpu_custom_call.1
$region0: #{tpu_custom_call.1}
  #allocation0 [shape = 'u32[]', space=smem, size = 0x4, offset = 0x4, fixed_abs, tag = 'smem constant byte address 0x4 - core index']
  #allocation1 [shape = 'u32[144,128]{1,0:T(1,128)}', space=vmem, size = 0x12000, scoped, tag = 'internal scratch']
  #allocation2 [shape = 'f32[1,1]{1,0:T(1,128)S(1)}', space=vmem, size = 0x200, scoped, tag = 'scoped memory for tpu_custom_call.1']
  %s0 = inlined_call_operand.vmem [shape: f32[2,4,256], index: 0, kind: input, shape index: {}]
  %s1 = inlined_call_operand.vmem [shape: f32[24,4], index: 1, kind: input, shape index: {}]
  %s2 = inlined_call_operand.vmem [shape: f32[24,12], index: 2, kind: input, shape index: {}]
  %s3 = inlined_call_operand.vmem [shape: f32[12,256], index: 3, kind: input, shape index: {}]
  %s4 = inlined_call_operand.vmem [shape: f32[24,1], index: 4, kind: input, shape index: {}]
  %s5 = inlined_call_operand.vmem [shape: f32[256,16], index: 5, kind: input, shape index: {}]
  %s6 = inlined_call_operand.vmem [shape: f32[1,24], index: 6, kind: input, shape index: {}]
  %s7 = inlined_call_operand.<no memory space> [shape: f32[1,1], index: 7, kind: input, shape index: {}]
  %s8 = inlined_call_operand.vmem [shape: f32[24,1], index: 8, kind: input, shape index: {}]
  %s9 = inlined_call_operand.vmem [shape: f32[24,1], index: 9, kind: input, shape index: {}]
  %s10 = inlined_call_operand.vmem [shape: f32[8,24], index: 10, kind: input, shape index: {}]
  %s11 = inlined_call_operand.hbm [shape: f32[2,8,16], index: 11, kind: output, shape index: {}]
  %s12 = sld [smem:[#allocation0]]
  $region77: #{tpu_custom_call.1} parent=0
    _
  %s14 = ssub.s32 1, %s12
  %s15 = scalar_select 0, %s14, %s12
  %v16 = vstv %s7
  %17 = vst [vmem:[#allocation2] sm:$0x1] %v16
  $region1: #{tpu_custom_call.1} parent=0
    #allocation3 [shape = 'u8[8192]{0}', space=vmem, size = 0x2000, scoped, tag = 'output window, operand 0']
    #allocation4 [shape = 's32[2]{0}', space=sflag, size = 0x8, scoped, tag = 'scoped memory for tpu_custom_call.1']
    %18 = vsyncpa [#allocation4], 0
    %s19 = scalar_lea.sflag [#allocation4], 1
    %20 = vsyncpa %s19, 0
    loop: start=0, step=1, limit=4
    $region2: #{tpu_custom_call.1} parent=1 // loop_pre_header
      _
    $region3: #{tpu_custom_call.1} parent=1 // loop_header
      %s22 = sphi 0, %s26
      %p23 = scmp.ge.s32.totalorder %s22, 4
      %s32 = sphi 0, %s34
      %s35 = sphi 0, %s32
      %s36 = sphi 0, %s35
      %s52 = sphi 0, %s36
      %s56 = sphi 0, %s56
      %s58 = sphi 0, %s56
      %s59 = sphi 0, %s58
      %s73 = sphi 0, %s59
      %s77 = sphi 0, %s77
      %s79 = sphi 0, %s77
      %s80 = sphi 0, %s79
      %s94 = sphi 0, %s80
      %s98 = sphi 0, %s98
      %s100 = sphi 0, %s98
      %s101 = sphi 0, %s100
      %s115 = sphi 0, %s101
      %s119 = sphi 0, %s119
      %s121 = sphi 0, %s119
      %s122 = sphi 0, %s121
      %s136 = sphi 0, %s122
      %s140 = sphi 0, %s140
      %s142 = sphi 0, %s140
      %s143 = sphi 0, %s142
      %s157 = sphi 0, %s143
      %s161 = sphi 0, %s161
      %s163 = sphi 0, %s161
      %s164 = sphi 0, %s163
      %s178 = sphi 0, %s164
      %s182 = sphi 0, %s182
      %s184 = sphi 0, %s182
      %s185 = sphi 0, %s184
      %s199 = sphi 0, %s185
      %s203 = sphi 0, %s203
      %s205 = sphi 0, %s203
      %s206 = sphi 0, %s205
      %s220 = sphi 0, %s206
      %s224 = sphi 0, %s224
      %s226 = sphi 0, %s224
      %s227 = sphi 0, %s226
      %s241 = sphi 0, %s227
      %s245 = sphi 0, %s245
      %s247 = sphi 0, %s245
      %s248 = sphi 0, %s247
      %s262 = sphi 0, %s248
      %s268 = sphi 0, %s270
      %s271 = sphi 0, %s268
      %s272 = sphi 0, %s271
      %s288 = sphi 0, %s272
    $region4: #{tpu_custom_call.1} parent=1 // loop_header_branch
      %25 = sbr.rel (%p23) target = $region8
    $region5: #{tpu_custom_call.1} parent=1 // loop_body
      %s27 = ssub.s32 %s22, 1
      %s28 = ssub.s32 %s22, 2
      %s29 = sadd.s32 %s22, 1
      %s30 = ssub.s32 %s22, %s29
      %p31 = scmp.eq.s32.totalorder %s30, 0
      %s33 = sadd.s32 %s32, 1
      %s34 = scalar_select %p31, %s32, %s33
      %p37 = pneg %p31
      %p38 = scmp.eq.s32.totalorder %s22, 1
      %p39 = por %p37, %p38
      %p40 = scmp.ne.s32.totalorder %s32, %s35
      %p41 = scmp.eq.s32.totalorder %s22, 0
      %p42 = por %p40, %p41
      %p43 = scmp.ne.s32.totalorder %s32, %s35
      %p44 = scmp.eq.s32.totalorder %s27, 1
      %p45 = por %p43, %p44
      %p46 = scmp.ne.s32.totalorder %s35, %s36
      %p47 = scmp.eq.s32.totalorder %s27, 0
      %p48 = por %p46, %p47
      %p49 = scmp.ne.s32.totalorder %s35, %s36
      %p50 = scmp.eq.s32.totalorder %s28, 1
      %p51 = por %p49, %p50
      %p53 = scmp.ne.s32.totalorder %s36, %s52
      %p54 = scmp.eq.s32.totalorder %s28, 0
      %p55 = por %p53, %p54
      %s57 = sadd.s32 %s56, 1
      %p60 = scmp.eq.s32.totalorder %s22, 1
      %p61 = scmp.ne.s32.totalorder %s56, %s58
      %p62 = scmp.eq.s32.totalorder %s22, 0
      %p63 = por %p61, %p62
      %p64 = scmp.ne.s32.totalorder %s56, %s58
      %p65 = scmp.eq.s32.totalorder %s27, 1
      %p66 = por %p64, %p65
      %p67 = scmp.ne.s32.totalorder %s58, %s59
      %p68 = scmp.eq.s32.totalorder %s27, 0
      %p69 = por %p67, %p68
      %p70 = scmp.ne.s32.totalorder %s58, %s59
      %p71 = scmp.eq.s32.totalorder %s28, 1
      %p72 = por %p70, %p71
      %p74 = scmp.ne.s32.totalorder %s59, %s73
      %p75 = scmp.eq.s32.totalorder %s28, 0
      %p76 = por %p74, %p75
      %s78 = sadd.s32 %s77, 1
      %p81 = scmp.eq.s32.totalorder %s22, 1
      %p82 = scmp.ne.s32.totalorder %s77, %s79
      %p83 = scmp.eq.s32.totalorder %s22, 0
      %p84 = por %p82, %p83
      %p85 = scmp.ne.s32.totalorder %s77, %s79
      %p86 = scmp.eq.s32.totalorder %s27, 1
      %p87 = por %p85, %p86
      %p88 = scmp.ne.s32.totalorder %s79, %s80
      %p89 = scmp.eq.s32.totalorder %s27, 0
      %p90 = por %p88, %p89
      %p91 = scmp.ne.s32.totalorder %s79, %s80
      %p92 = scmp.eq.s32.totalorder %s28, 1
      %p93 = por %p91, %p92
      %p95 = scmp.ne.s32.totalorder %s80, %s94
      %p96 = scmp.eq.s32.totalorder %s28, 0
      %p97 = por %p95, %p96
      %s99 = sadd.s32 %s98, 1
      %p102 = scmp.eq.s32.totalorder %s22, 1
      %p103 = scmp.ne.s32.totalorder %s98, %s100
      %p104 = scmp.eq.s32.totalorder %s22, 0
      %p105 = por %p103, %p104
      %p106 = scmp.ne.s32.totalorder %s98, %s100
      %p107 = scmp.eq.s32.totalorder %s27, 1
      %p108 = por %p106, %p107
      %p109 = scmp.ne.s32.totalorder %s100, %s101
      %p110 = scmp.eq.s32.totalorder %s27, 0
      %p111 = por %p109, %p110
      %p112 = scmp.ne.s32.totalorder %s100, %s101
      %p113 = scmp.eq.s32.totalorder %s28, 1
      %p114 = por %p112, %p113
      %p116 = scmp.ne.s32.totalorder %s101, %s115
      %p117 = scmp.eq.s32.totalorder %s28, 0
      %p118 = por %p116, %p117
      %s120 = sadd.s32 %s119, 1
      %p123 = scmp.eq.s32.totalorder %s22, 1
      %p124 = scmp.ne.s32.totalorder %s119, %s121
      %p125 = scmp.eq.s32.totalorder %s22, 0
      %p126 = por %p124, %p125
      %p127 = scmp.ne.s32.totalorder %s119, %s121
      %p128 = scmp.eq.s32.totalorder %s27, 1
      %p129 = por %p127, %p128
      %p130 = scmp.ne.s32.totalorder %s121, %s122
      %p131 = scmp.eq.s32.totalorder %s27, 0
      %p132 = por %p130, %p131
      %p133 = scmp.ne.s32.totalorder %s121, %s122
      %p134 = scmp.eq.s32.totalorder %s28, 1
      %p135 = por %p133, %p134
      %p137 = scmp.ne.s32.totalorder %s122, %s136
      %p138 = scmp.eq.s32.totalorder %s28, 0
      %p139 = por %p137, %p138
      %s141 = sadd.s32 %s140, 1
      %p144 = scmp.eq.s32.totalorder %s22, 1
      %p145 = scmp.ne.s32.totalorder %s140, %s142
      %p146 = scmp.eq.s32.totalorder %s22, 0
      %p147 = por %p145, %p146
      %p148 = scmp.ne.s32.totalorder %s140, %s142
      %p149 = scmp.eq.s32.totalorder %s27, 1
      %p150 = por %p148, %p149
      %p151 = scmp.ne.s32.totalorder %s142, %s143
      %p152 = scmp.eq.s32.totalorder %s27, 0
      %p153 = por %p151, %p152
      %p154 = scmp.ne.s32.totalorder %s142, %s143
      %p155 = scmp.eq.s32.totalorder %s28, 1
      %p156 = por %p154, %p155
      %p158 = scmp.ne.s32.totalorder %s143, %s157
      %p159 = scmp.eq.s32.totalorder %s28, 0
      %p160 = por %p158, %p159
      %s162 = sadd.s32 %s161, 1
      %p165 = scmp.eq.s32.totalorder %s22, 1
      %p166 = scmp.ne.s32.totalorder %s161, %s163
      %p167 = scmp.eq.s32.totalorder %s22, 0
      %p168 = por %p166, %p167
      %p169 = scmp.ne.s32.totalorder %s161, %s163
      %p170 = scmp.eq.s32.totalorder %s27, 1
      %p171 = por %p169, %p170
      %p172 = scmp.ne.s32.totalorder %s163, %s164
      %p173 = scmp.eq.s32.totalorder %s27, 0
      %p174 = por %p172, %p173
      %p175 = scmp.ne.s32.totalorder %s163, %s164
      %p176 = scmp.eq.s32.totalorder %s28, 1
      %p177 = por %p175, %p176
      %p179 = scmp.ne.s32.totalorder %s164, %s178
      %p180 = scmp.eq.s32.totalorder %s28, 0
      %p181 = por %p179, %p180
      %s183 = sadd.s32 %s182, 1
      %p186 = scmp.eq.s32.totalorder %s22, 1
      %p187 = scmp.ne.s32.totalorder %s182, %s184
      %p188 = scmp.eq.s32.totalorder %s22, 0
      %p189 = por %p187, %p188
      %p190 = scmp.ne.s32.totalorder %s182, %s184
      %p191 = scmp.eq.s32.totalorder %s27, 1
      %p192 = por %p190, %p191
      %p193 = scmp.ne.s32.totalorder %s184, %s185
      %p194 = scmp.eq.s32.totalorder %s27, 0
      %p195 = por %p193, %p194
      %p196 = scmp.ne.s32.totalorder %s184, %s185
      %p197 = scmp.eq.s32.totalorder %s28, 1
      %p198 = por %p196, %p197
      %p200 = scmp.ne.s32.totalorder %s185, %s199
      %p201 = scmp.eq.s32.totalorder %s28, 0
      %p202 = por %p200, %p201
      %s204 = sadd.s32 %s203, 1
      %p207 = scmp.eq.s32.totalorder %s22, 1
      %p208 = scmp.ne.s32.totalorder %s203, %s205
      %p209 = scmp.eq.s32.totalorder %s22, 0
      %p210 = por %p208, %p209
      %p211 = scmp.ne.s32.totalorder %s203, %s205
      %p212 = scmp.eq.s32.totalorder %s27, 1
      %p213 = por %p211, %p212
      %p214 = scmp.ne.s32.totalorder %s205, %s206
      %p215 = scmp.eq.s32.totalorder %s27, 0
      %p216 = por %p214, %p215
      %p217 = scmp.ne.s32.totalorder %s205, %s206
      %p218 = scmp.eq.s32.totalorder %s28, 1
      %p219 = por %p217, %p218
      %p221 = scmp.ne.s32.totalorder %s206, %s220
      %p222 = scmp.eq.s32.totalorder %s28, 0
      %p223 = por %p221, %p222
      %s225 = sadd.s32 %s224, 1
      %p228 = scmp.eq.s32.totalorder %s22, 1
      %p229 = scmp.ne.s32.totalorder %s224, %s226
      %p230 = scmp.eq.s32.totalorder %s22, 0
      %p231 = por %p229, %p230
      %p232 = scmp.ne.s32.totalorder %s224, %s226
      %p233 = scmp.eq.s32.totalorder %s27, 1
      %p234 = por %p232, %p233
      %p235 = scmp.ne.s32.totalorder %s226, %s227
      %p236 = scmp.eq.s32.totalorder %s27, 0
      %p237 = por %p235, %p236
      %p238 = scmp.ne.s32.totalorder %s226, %s227
      %p239 = scmp.eq.s32.totalorder %s28, 1
      %p240 = por %p238, %p239
      %p242 = scmp.ne.s32.totalorder %s227, %s241
      %p243 = scmp.eq.s32.totalorder %s28, 0
      %p244 = por %p242, %p243
      %s246 = sadd.s32 %s245, 1
      %p249 = scmp.eq.s32.totalorder %s22, 1
      %p250 = scmp.ne.s32.totalorder %s245, %s247
      %p251 = scmp.eq.s32.totalorder %s22, 0
      %p252 = por %p250, %p251
      %p253 = scmp.ne.s32.totalorder %s245, %s247
      %p254 = scmp.eq.s32.totalorder %s27, 1
      %p255 = por %p253, %p254
      %p256 = scmp.ne.s32.totalorder %s247, %s248
      %p257 = scmp.eq.s32.totalorder %s27, 0
      %p258 = por %p256, %p257
      %p259 = scmp.ne.s32.totalorder %s247, %s248
      %p260 = scmp.eq.s32.totalorder %s28, 1
      %p261 = por %p259, %p260
      %p263 = scmp.ne.s32.totalorder %s248, %s262
      %p264 = scmp.eq.s32.totalorder %s28, 0
      %p265 = por %p263, %p264
      %s266 = ssub.s32 %s22, %s29
      %p267 = scmp.eq.s32.totalorder %s266, 0
      %s269 = sadd.s32 %s268, 1
      %s270 = scalar_select %p267, %s268, %s269
      %p273 = pneg %p267
      %p274 = scmp.eq.s32.totalorder %s22, 1
      %p275 = por %p273, %p274
      %p276 = scmp.ne.s32.totalorder %s268, %s271
      %p277 = scmp.eq.s32.totalorder %s22, 0
      %p278 = por %p276, %p277
      %p279 = scmp.ne.s32.totalorder %s268, %s271
      %p280 = scmp.eq.s32.totalorder %s27, 1
      %p281 = por %p279, %p280
      %p282 = scmp.ne.s32.totalorder %s271, %s272
      %p283 = scmp.eq.s32.totalorder %s27, 0
      %p284 = por %p282, %p283
      %p285 = scmp.ne.s32.totalorder %s271, %s272
      %p286 = scmp.eq.s32.totalorder %s28, 1
      %p287 = por %p285, %p286
      %p289 = scmp.ne.s32.totalorder %s272, %s288
      %p290 = scmp.eq.s32.totalorder %s28, 0
      %p291 = por %p289, %p290
      %p292 = scmp.le.s32.totalorder 1, %s22
      %p293 = scmp.lt.s32.totalorder %s22, 3
      %p294 = pnand %p292, %p293
      %p295 = pneg %p294
      // Predicated region
      $region9: #{tpu_custom_call.1} parent=5 // pred_check
        _
      $region10: #{tpu_custom_call.1} parent=5 // pred_check_branch
        %297 = sbr.rel (%p294) target = $region12
      $region11: #{tpu_custom_call.1} parent=5 // pred_region
        %s298 = ssub.s32 %s22, 1
        // Predicated region
        $region13: #{tpu_custom_call.1} parent=11 // pred_check
          %p299 = pneg %p69
        $region14: #{tpu_custom_call.1} parent=11 // pred_check_branch
          %301 = sbr.rel (%p299) target = $region16
        $region15: #{tpu_custom_call.1} parent=11 // pred_region
          _
        $region16: #{tpu_custom_call.1} parent=11 // pred_fallthru
          _
        // Predicated region
        $region17: #{tpu_custom_call.1} parent=11 // pred_check
          %p302 = pneg %p90
        $region18: #{tpu_custom_call.1} parent=11 // pred_check_branch
          %304 = sbr.rel (%p302) target = $region20
        $region19: #{tpu_custom_call.1} parent=11 // pred_region
          _
        $region20: #{tpu_custom_call.1} parent=11 // pred_fallthru
          _
        // Predicated region
        $region21: #{tpu_custom_call.1} parent=11 // pred_check
          %p305 = pneg %p111
        $region22: #{tpu_custom_call.1} parent=11 // pred_check_branch
          %307 = sbr.rel (%p305) target = $region24
        $region23: #{tpu_custom_call.1} parent=11 // pred_region
          _
        $region24: #{tpu_custom_call.1} parent=11 // pred_fallthru
          _
        // Predicated region
        $region25: #{tpu_custom_call.1} parent=11 // pred_check
          %p308 = pneg %p132
        $region26: #{tpu_custom_call.1} parent=11 // pred_check_branch
          %310 = sbr.rel (%p308) target = $region28
        $region27: #{tpu_custom_call.1} parent=11 // pred_region
          _
        $region28: #{tpu_custom_call.1} parent=11 // pred_fallthru
          _
        // Predicated region
        $region29: #{tpu_custom_call.1} parent=11 // pred_check
          %p311 = pneg %p153
        $region30: #{tpu_custom_call.1} parent=11 // pred_check_branch
          %313 = sbr.rel (%p311) target = $region32
        $region31: #{tpu_custom_call.1} parent=11 // pred_region
          _
        $region32: #{tpu_custom_call.1} parent=11 // pred_fallthru
          _
        // Predicated region
        $region33: #{tpu_custom_call.1} parent=11 // pred_check
          %p314 = pneg %p174
        $region34: #{tpu_custom_call.1} parent=11 // pred_check_branch
          %316 = sbr.rel (%p314) target = $region36
        $region35: #{tpu_custom_call.1} parent=11 // pred_region
          _
        $region36: #{tpu_custom_call.1} parent=11 // pred_fallthru
          _
        // Predicated region
        $region37: #{tpu_custom_call.1} parent=11 // pred_check
          %p317 = pneg %p195
        $region38: #{tpu_custom_call.1} parent=11 // pred_check_branch
          %319 = sbr.rel (%p317) target = $region40
        $region39: #{tpu_custom_call.1} parent=11 // pred_region
          _
        $region40: #{tpu_custom_call.1} parent=11 // pred_fallthru
          _
        // Predicated region
        $region41: #{tpu_custom_call.1} parent=11 // pred_check
          %p320 = pneg %p216
        $region42: #{tpu_custom_call.1} parent=11 // pred_check_branch
          %322 = sbr.rel (%p320) target = $region44
        $region43: #{tpu_custom_call.1} parent=11 // pred_region
          _
        $region44: #{tpu_custom_call.1} parent=11 // pred_fallthru
          _
        // Predicated region
        $region45: #{tpu_custom_call.1} parent=11 // pred_check
          %p323 = pneg %p237
        $region46: #{tpu_custom_call.1} parent=11 // pred_check_branch
          %325 = sbr.rel (%p323) target = $region48
        $region47: #{tpu_custom_call.1} parent=11 // pred_region
          _
        $region48: #{tpu_custom_call.1} parent=11 // pred_fallthru
          _
        // Predicated region
        $region49: #{tpu_custom_call.1} parent=11 // pred_check
          %p326 = pneg %p258
        $region50: #{tpu_custom_call.1} parent=11 // pred_check_branch
          %328 = sbr.rel (%p326) target = $region52
        $region51: #{tpu_custom_call.1} parent=11 // pred_region
          _
        $region52: #{tpu_custom_call.1} parent=11 // pred_fallthru
          _
      $region12: #{tpu_custom_call.1} parent=5 // pred_fallthru
        _
      %p329 = scmp.lt.s32.totalorder %s22, 2
      // Predicated region
      $region53: #{tpu_custom_call.1} parent=5 // pred_check
        %p330 = pneg %p329
      $region54: #{tpu_custom_call.1} parent=5 // pred_check_branch
        %332 = sbr.rel (%p330) target = $region56
      $region55: #{tpu_custom_call.1} parent=5 // pred_region
        // Predicated region
        $region57: #{tpu_custom_call.1} parent=55 // pred_check
          %p333 = pneg %p42
        $region58: #{tpu_custom_call.1} parent=55 // pred_check_branch
          %335 = sbr.rel (%p333) target = $region60
        $region59: #{tpu_custom_call.1} parent=55 // pred_region
          %p336 = scmp.lt.s32.totalorder %s22, 1
          %s337 = scalar_select %p336, %s22, 1
          %s338 = smul.addr %s337, 2
          %s339 = smul.addr %s338, 4
          %s340 = scalar_lea.vmem %s0, %s339
        $region60: #{tpu_custom_call.1} parent=55 // pred_fallthru
          _
      $region56: #{tpu_custom_call.1} parent=5 // pred_fallthru
        _
      %p341 = scmp.le.s32.totalorder 1, %s22
      %p342 = scmp.lt.s32.totalorder %s22, 3
      %p343 = pnand %p341, %p342
      %p344 = pneg %p343
      // Predicated region
      $region61: #{tpu_custom_call.1} parent=5 // pred_check
        _
      $region62: #{tpu_custom_call.1} parent=5 // pred_check_branch
        %346 = sbr.rel (%p343) target = $region64
      $region63: #{tpu_custom_call.1} parent=5 // pred_region
        %s347 = ssub.s32 %s22, 1
        %p348 = scmp.lt.s32.totalorder %s27, 1
        %s349 = scalar_select %p348, %s27, 1
        %s350 = smul.addr %s349, 2
        %s351 = smul.addr %s350, 4
        %s352 = scalar_lea.vmem %s0, %s351
        %p353 = pneg %p48
        %p354 = pneg %p45
        %p355 = pneg %p69
        %p356 = pneg %p66
        %p357 = pneg %p90
        %p358 = pneg %p87
        %p359 = pneg %p111
        %p360 = pneg %p108
        %p361 = pneg %p132
        %p362 = pneg %p129
        %p363 = pneg %p153
        %p364 = pneg %p150
        %p365 = pneg %p174
        %p366 = pneg %p171
        %p367 = pneg %p195
        %p368 = pneg %p192
        %p369 = pneg %p216
        %p370 = pneg %p213
        %p371 = pneg %p237
        %p372 = pneg %p234
        %p373 = pneg %p258
        %p374 = pneg %p255
        %p375 = pneg %p284
        %p376 = pneg %p281
        %s377 = sand.u32 %s271, 1
        %s378 = scalar_lea.sflag [#allocation4], %s377
        %s379 = sand.u32 %s271, 1
        %s380 = smul.addr %s379, 8
        %s381 = scalar_lea.vmem [#allocation3], %s380
        %p382 = scmp.lt.s32.totalorder %s27, 1
        %s383 = scalar_select %p382, %s27, 1
        %s384 = smul.addr %s383, 2
        %s385 = smul.addr %s384, 4
        %s386 = scalar_lea.vmem %s0, %s385
        %v387 = vld [vmem:[%s386] sm:$0xff]
        %v388 = vld [vmem:[%s1] sm:$0xff]
        %v389 = vld [vmem:[%s1 + $0x8] sm:$0xff]
        %v390 = vld [vmem:[%s1 + $0x10] sm:$0xff]
        %v392 = vlaneseq
        %v393 = vshrl.u32 %v392, 7
        %v394 = vsub.s32 0, %v393
        %v395 = vrot.slane %v387, %v394
        %v396 = vlaneseq
        %v397 = vshrl.u32 %v396, 7
        %v398 = vsub.s32 4, %v397
        %v399 = vrot.slane %v387, %v398
        %v402 = vlaneseq
        %v403 = vshrl.u32 %v402, 7
        %v404 = vsub.s32 0, %v403
        %v405 = vrot.slane %v395, %v404
        %v406 = vlaneseq
        %v407 = vshrl.u32 %v406, 7
        %v408 = vsub.s32 0, %v407
        %v409 = vrot.slane %v399, %v408
        %411 = vset.pattern.permute.xlu0 0
        %412 = vperm.xlu0 %411, %v388
        %v413 = vpop.permute.xlu0 %412
        %416 = vset.pattern.permute.xlu0 0
        %417 = vperm.xlu0 %416, %v389
        %v418 = vpop.permute.xlu0 %417
        %421 = vset.pattern.permute.xlu0 0
        %422 = vperm.xlu0 %421, %v390
        %v423 = vpop.permute.xlu0 %422
        %v425 = vmul.f32 %v405, %v413
        %v426 = vmul.f32 %v409, %v413
        %v427 = vmul.f32 %v405, %v418
        %v428 = vmul.f32 %v409, %v418
        %v429 = vmul.f32 %v405, %v423
        %v430 = vmul.f32 %v409, %v423
        %v431 = vlaneseq
        %v432 = vshrl.u32 %v431, 7
        %v433 = vsub.s32 1, %v432
        %v434 = vrot.slane %v387, %v433
        %v435 = vlaneseq
        %v436 = vshrl.u32 %v435, 7
        %v437 = vsub.s32 5, %v436
        %v438 = vrot.slane %v387, %v437
        %v441 = vlaneseq
        %v442 = vshrl.u32 %v441, 7
        %v443 = vsub.s32 1, %v442
        %v444 = vrot.slane %v434, %v443
        %v445 = vlaneseq
        %v446 = vshrl.u32 %v445, 7
        %v447 = vsub.s32 1, %v446
        %v448 = vrot.slane %v438, %v447
        %449 = vset.pattern.permute.xlu0 1
        %450 = vperm.xlu0 %449, %v388
        %v451 = vpop.permute.xlu0 %450
        %453 = vset.pattern.permute.xlu0 1
        %454 = vperm.xlu0 %453, %v389
        %v455 = vpop.permute.xlu0 %454
        %457 = vset.pattern.permute.xlu0 1
        %458 = vperm.xlu0 %457, %v390
        %v459 = vpop.permute.xlu0 %458
        %v461 = vmul.f32 %v444, %v451
        %v462 = vmul.f32 %v448, %v451
        %v463 = vmul.f32 %v444, %v455
        %v464 = vmul.f32 %v448, %v455
        %v465 = vmul.f32 %v444, %v459
        %v466 = vmul.f32 %v448, %v459
        %v467 = vadd.f32 %v425, %v461
        %v468 = vadd.f32 %v426, %v462
        %v469 = vadd.f32 %v427, %v463
        %v470 = vadd.f32 %v428, %v464
        %v471 = vadd.f32 %v429, %v465
        %v472 = vadd.f32 %v430, %v466
        %v473 = vlaneseq
        %v474 = vshrl.u32 %v473, 7
        %v475 = vsub.s32 2, %v474
        %v476 = vrot.slane %v387, %v475
        %v477 = vlaneseq
        %v478 = vshrl.u32 %v477, 7
        %v479 = vsub.s32 6, %v478
        %v480 = vrot.slane %v387, %v479
        %v483 = vlaneseq
        %v484 = vshrl.u32 %v483, 7
        %v485 = vsub.s32 2, %v484
        %v486 = vrot.slane %v476, %v485
        %v487 = vlaneseq
        %v488 = vshrl.u32 %v487, 7
        %v489 = vsub.s32 2, %v488
        %v490 = vrot.slane %v480, %v489
        %491 = vset.pattern.permute.xlu0 2
        %492 = vperm.xlu0 %491, %v388
        %v493 = vpop.permute.xlu0 %492
        %495 = vset.pattern.permute.xlu0 2
        %496 = vperm.xlu0 %495, %v389
        %v497 = vpop.permute.xlu0 %496
        %499 = vset.pattern.permute.xlu0 2
        %500 = vperm.xlu0 %499, %v390
        %v501 = vpop.permute.xlu0 %500
        %v503 = vmul.f32 %v486, %v493
        %v504 = vmul.f32 %v490, %v493
        %v505 = vmul.f32 %v486, %v497
        %v506 = vmul.f32 %v490, %v497
        %v507 = vmul.f32 %v486, %v501
        %v508 = vmul.f32 %v490, %v501
        %v509 = vadd.f32 %v467, %v503
        %v510 = vadd.f32 %v468, %v504
        %v511 = vadd.f32 %v469, %v505
        %v512 = vadd.f32 %v470, %v506
        %v513 = vadd.f32 %v471, %v507
        %v514 = vadd.f32 %v472, %v508
        %v515 = vlaneseq
        %v516 = vshrl.u32 %v515, 7
        %v517 = vsub.s32 3, %v516
        %v518 = vrot.slane %v387, %v517
        %v519 = vlaneseq
        %v520 = vshrl.u32 %v519, 7
        %v521 = vsub.s32 7, %v520
        %v522 = vrot.slane %v387, %v521
        %v525 = vlaneseq
        %v526 = vshrl.u32 %v525, 7
        %v527 = vsub.s32 3, %v526
        %v528 = vrot.slane %v518, %v527
        %v529 = vlaneseq
        %v530 = vshrl.u32 %v529, 7
        %v531 = vsub.s32 3, %v530
        %v532 = vrot.slane %v522, %v531
        %533 = vset.pattern.permute.xlu0 3
        %534 = vperm.xlu0 %533, %v388
        %v535 = vpop.permute.xlu0 %534
        %537 = vset.pattern.permute.xlu0 3
        %538 = vperm.xlu0 %537, %v389
        %v539 = vpop.permute.xlu0 %538
        %541 = vset.pattern.permute.xlu0 3
        %542 = vperm.xlu0 %541, %v390
        %v543 = vpop.permute.xlu0 %542
        %v545 = vmul.f32 %v528, %v535
        %v546 = vmul.f32 %v532, %v535
        %v547 = vmul.f32 %v528, %v539
        %v548 = vmul.f32 %v532, %v539
        %v549 = vmul.f32 %v528, %v543
        %v550 = vmul.f32 %v532, %v543
        %v551 = vadd.f32 %v509, %v545
        %v552 = vadd.f32 %v510, %v546
        %v553 = vadd.f32 %v511, %v547
        %v554 = vadd.f32 %v512, %v548
        %v555 = vadd.f32 %v513, %v549
        %v556 = vadd.f32 %v514, %v550
        %v557 = vld [vmem:[%s2] sm:$0xff]
        %v558 = vld [vmem:[%s2 + $0x8] sm:$0xff]
        %v559 = vld [vmem:[%s2 + $0x10] sm:$0xff]
        %v560 = vld [vmem:[%s3] sm:$0xff]
        %v561 = vld [vmem:[%s3 + $0x8] sm:$0xff]
        %v562 = vld [vmem:[%s3 + $0x10] sm:$0xf]
        %v563 = vld [vmem:[%s3 + $0x18] sm:$0xf]
        %564 = vrot.lane.b32.xlu0 %v551, 2
        %v565 = vpop.permute.xlu0 %564
        %566 = vrot.lane.b32.xlu0 %v553, 2
        %v567 = vpop.permute.xlu0 %566
        %568 = vrot.lane.b32.xlu0 %v555, 2
        %v569 = vpop.permute.xlu0 %568
        %570 = vrot.lane.b32.xlu0 %v552, 2
        %v571 = vpop.permute.xlu0 %570
        %572 = vrot.lane.b32.xlu0 %v554, 2
        %v573 = vpop.permute.xlu0 %572
        %574 = vrot.lane.b32.xlu0 %v556, 2
        %v575 = vpop.permute.xlu0 %574
        %v576 = vlaneseq
        %v577 = vand.u32 %v576, 127
        %vm578 = vcmp.lt.s32.totalorder %v577, 2
        %v579 = vsel %vm578, %v565, %v571
        %v580 = vsel %vm578, %v567, %v573
        %v581 = vsel %vm578, %v569, %v575
        %v582 = vsel %vm578, %v571, %v565
        %v583 = vsel %vm578, %v573, %v567
        %v584 = vsel %vm578, %v575, %v569
        %v585 = vlaneseq
        %v586 = vshrl.u32 %v585, 7
        %v587 = vsub.s32 0, %v586
        %v588 = vrot.slane %v560, %v587
        %v589 = vlaneseq
        %v590 = vshrl.u32 %v589, 7
        %v591 = vsub.s32 0, %v590
        %v592 = vrot.slane %v561, %v591
        %v593 = vmul.f32 %v582, %v588
        %v594 = vmul.f32 %v579, %v592
        %v595 = vmul.f32 %v583, %v588
        %v596 = vmul.f32 %v580, %v592
        %v597 = vmul.f32 %v584, %v588
        %v598 = vmul.f32 %v581, %v592
        %600 = vset.pattern.permute.xlu0 0
        %601 = vperm.xlu0 %600, %v557
        %v602 = vpop.permute.xlu0 %601
        %605 = vset.pattern.permute.xlu0 0
        %606 = vperm.xlu0 %605, %v558
        %v607 = vpop.permute.xlu0 %606
        %610 = vset.pattern.permute.xlu0 0
        %611 = vperm.xlu0 %610, %v559
        %v612 = vpop.permute.xlu0 %611
        %v614 = vmul.f32 %v593, %v602
        %v615 = vmul.f32 %v594, %v602
        %v616 = vmul.f32 %v595, %v607
        %v617 = vmul.f32 %v596, %v607
        %v618 = vmul.f32 %v597, %v612
        %v619 = vmul.f32 %v598, %v612
        %620 = vrot.lane.b32.xlu0 %v551, 1
        %v621 = vpop.permute.xlu0 %620
        %622 = vrot.lane.b32.xlu0 %v553, 1
        %v623 = vpop.permute.xlu0 %622
        %624 = vrot.lane.b32.xlu0 %v555, 1
        %v625 = vpop.permute.xlu0 %624
        %626 = vrot.lane.b32.xlu0 %v552, 1
        %v627 = vpop.permute.xlu0 %626
        %628 = vrot.lane.b32.xlu0 %v554, 1
        %v629 = vpop.permute.xlu0 %628
        %630 = vrot.lane.b32.xlu0 %v556, 1
        %v631 = vpop.permute.xlu0 %630
        %vm632 = vcmp.lt.s32.totalorder %v577, 1
        %v633 = vsel %vm632, %v621, %v627
        %v634 = vsel %vm632, %v623, %v629
        %v635 = vsel %vm632, %v625, %v631
        %v636 = vsel %vm632, %v627, %v621
        %v637 = vsel %vm632, %v629, %v623
        %v638 = vsel %vm632, %v631, %v625
        %v639 = vlaneseq
        %v640 = vshrl.u32 %v639, 7
        %v641 = vsub.s32 1, %v640
        %v642 = vrot.slane %v560, %v641
        %v643 = vlaneseq
        %v644 = vshrl.u32 %v643, 7
        %v645 = vsub.s32 1, %v644
        %v646 = vrot.slane %v561, %v645
        %v647 = vmul.f32 %v636, %v642
        %v648 = vmul.f32 %v633, %v646
        %v649 = vmul.f32 %v637, %v642
        %v650 = vmul.f32 %v634, %v646
        %v651 = vmul.f32 %v638, %v642
        %v652 = vmul.f32 %v635, %v646
        %653 = vset.pattern.permute.xlu0 1
        %654 = vperm.xlu0 %653, %v557
        %v655 = vpop.permute.xlu0 %654
        %657 = vset.pattern.permute.xlu0 1
        %658 = vperm.xlu0 %657, %v558
        %v659 = vpop.permute.xlu0 %658
        %661 = vset.pattern.permute.xlu0 1
        %662 = vperm.xlu0 %661, %v559
        %v663 = vpop.permute.xlu0 %662
        %v665 = vmul.f32 %v647, %v655
        %v666 = vmul.f32 %v648, %v655
        %v667 = vmul.f32 %v649, %v659
        %v668 = vmul.f32 %v650, %v659
        %v669 = vmul.f32 %v651, %v663
        %v670 = vmul.f32 %v652, %v663
        %v671 = vadd.f32 %v614, %v665
        %v672 = vadd.f32 %v615, %v666
        %v673 = vadd.f32 %v616, %v667
        %v674 = vadd.f32 %v617, %v668
        %v675 = vadd.f32 %v618, %v669
        %v676 = vadd.f32 %v619, %v670
        %677 = vset.pattern.permute.xlu0 2
        %678 = vperm.xlu0 %677, %v557
        %v679 = vpop.permute.xlu0 %678
        %681 = vset.pattern.permute.xlu0 2
        %682 = vperm.xlu0 %681, %v558
        %v683 = vpop.permute.xlu0 %682
        %685 = vset.pattern.permute.xlu0 2
        %686 = vperm.xlu0 %685, %v559
        %v687 = vpop.permute.xlu0 %686
        %v689 = vmul.f32 %v551, %v679
        %v690 = vmul.f32 %v552, %v679
        %v691 = vmul.f32 %v553, %v683
        %v692 = vmul.f32 %v554, %v683
        %v693 = vmul.f32 %v555, %v687
        %v694 = vmul.f32 %v556, %v687
        %v695 = vadd.f32 %v671, %v689
        %v696 = vadd.f32 %v672, %v690
        %v697 = vadd.f32 %v673, %v691
        %v698 = vadd.f32 %v674, %v692
        %v699 = vadd.f32 %v675, %v693
        %v700 = vadd.f32 %v676, %v694
        %701 = vrot.lane.b32.xlu0 %v551, 127
        %v702 = vpop.permute.xlu0 %701
        %703 = vrot.lane.b32.xlu0 %v553, 127
        %v704 = vpop.permute.xlu0 %703
        %705 = vrot.lane.b32.xlu0 %v555, 127
        %v706 = vpop.permute.xlu0 %705
        %707 = vrot.lane.b32.xlu0 %v552, 127
        %v708 = vpop.permute.xlu0 %707
        %709 = vrot.lane.b32.xlu0 %v554, 127
        %v710 = vpop.permute.xlu0 %709
        %711 = vrot.lane.b32.xlu0 %v556, 127
        %v712 = vpop.permute.xlu0 %711
        %vm713 = vcmp.lt.s32.totalorder %v577, 127
        %v714 = vsel %vm713, %v702, %v708
        %v715 = vsel %vm713, %v704, %v710
        %v716 = vsel %vm713, %v706, %v712
        %v717 = vsel %vm713, %v708, %v702
        %v718 = vsel %vm713, %v710, %v704
        %v719 = vsel %vm713, %v712, %v706
        %v720 = vlaneseq
        %v721 = vshrl.u32 %v720, 7
        %v722 = vsub.s32 3, %v721
        %v723 = vrot.slane %v560, %v722
        %v724 = vlaneseq
        %v725 = vshrl.u32 %v724, 7
        %v726 = vsub.s32 3, %v725
        %v727 = vrot.slane %v561, %v726
        %v728 = vmul.f32 %v714, %v723
        %v729 = vmul.f32 %v717, %v727
        %v730 = vmul.f32 %v715, %v723
        %v731 = vmul.f32 %v718, %v727
        %v732 = vmul.f32 %v716, %v723
        %v733 = vmul.f32 %v719, %v727
        %734 = vset.pattern.permute.xlu0 3
        %735 = vperm.xlu0 %734, %v557
        %v736 = vpop.permute.xlu0 %735
        %738 = vset.pattern.permute.xlu0 3
        %739 = vperm.xlu0 %738, %v558
        %v740 = vpop.permute.xlu0 %739
        %742 = vset.pattern.permute.xlu0 3
        %743 = vperm.xlu0 %742, %v559
        %v744 = vpop.permute.xlu0 %743
        %v746 = vmul.f32 %v728, %v736
        %v747 = vmul.f32 %v729, %v736
        %v748 = vmul.f32 %v730, %v740
        %v749 = vmul.f32 %v731, %v740
        %v750 = vmul.f32 %v732, %v744
        %v751 = vmul.f32 %v733, %v744
        %v752 = vadd.f32 %v695, %v746
        %v753 = vadd.f32 %v696, %v747
        %v754 = vadd.f32 %v697, %v748
        %v755 = vadd.f32 %v698, %v749
        %v756 = vadd.f32 %v699, %v750
        %v757 = vadd.f32 %v700, %v751
        %758 = vrot.lane.b32.xlu0 %v551, 126
        %v759 = vpop.permute.xlu0 %758
        %760 = vrot.lane.b32.xlu0 %v553, 126
        %v761 = vpop.permute.xlu0 %760
        %762 = vrot.lane.b32.xlu0 %v555, 126
        %v763 = vpop.permute.xlu0 %762
        %764 = vrot.lane.b32.xlu0 %v552, 126
        %v765 = vpop.permute.xlu0 %764
        %766 = vrot.lane.b32.xlu0 %v554, 126
        %v767 = vpop.permute.xlu0 %766
        %768 = vrot.lane.b32.xlu0 %v556, 126
        %v769 = vpop.permute.xlu0 %768
        %vm770 = vcmp.lt.s32.totalorder %v577, 126
        %v771 = vsel %vm770, %v759, %v765
        %v772 = vsel %vm770, %v761, %v767
        %v773 = vsel %vm770, %v763, %v769
        %v774 = vsel %vm770, %v765, %v759
        %v775 = vsel %vm770, %v767, %v761
        %v776 = vsel %vm770, %v769, %v763
        %v777 = vlaneseq
        %v778 = vshrl.u32 %v777, 7
        %v779 = vsub.s32 4, %v778
        %v780 = vrot.slane %v560, %v779
        %v781 = vlaneseq
        %v782 = vshrl.u32 %v781, 7
        %v783 = vsub.s32 4, %v782
        %v784 = vrot.slane %v561, %v783
        %v785 = vmul.f32 %v771, %v780
        %v786 = vmul.f32 %v774, %v784
        %v787 = vmul.f32 %v772, %v780
        %v788 = vmul.f32 %v775, %v784
        %v789 = vmul.f32 %v773, %v780
        %v790 = vmul.f32 %v776, %v784
        %791 = vset.pattern.permute.xlu0 4
        %792 = vperm.xlu0 %791, %v557
        %v793 = vpop.permute.xlu0 %792
        %795 = vset.pattern.permute.xlu0 4
        %796 = vperm.xlu0 %795, %v558
        %v797 = vpop.permute.xlu0 %796
        %799 = vset.pattern.permute.xlu0 4
        %800 = vperm.xlu0 %799, %v559
        %v801 = vpop.permute.xlu0 %800
        %v803 = vmul.f32 %v785, %v793
        %v804 = vmul.f32 %v786, %v793
        %v805 = vmul.f32 %v787, %v797
        %v806 = vmul.f32 %v788, %v797
        %v807 = vmul.f32 %v789, %v801
        %v808 = vmul.f32 %v790, %v801
        %v809 = vadd.f32 %v752, %v803
        %v810 = vadd.f32 %v753, %v804
        %v811 = vadd.f32 %v754, %v805
        %v812 = vadd.f32 %v755, %v806
        %v813 = vadd.f32 %v756, %v807
        %v814 = vadd.f32 %v757, %v808
        %815 = vrot.lane.b32.xlu0 %v551, 125
        %v816 = vpop.permute.xlu0 %815
        %817 = vrot.lane.b32.xlu0 %v553, 125
        %v818 = vpop.permute.xlu0 %817
        %819 = vrot.lane.b32.xlu0 %v555, 125
        %v820 = vpop.permute.xlu0 %819
        %821 = vrot.lane.b32.xlu0 %v552, 125
        %v822 = vpop.permute.xlu0 %821
        %823 = vrot.lane.b32.xlu0 %v554, 125
        %v824 = vpop.permute.xlu0 %823
        %825 = vrot.lane.b32.xlu0 %v556, 125
        %v826 = vpop.permute.xlu0 %825
        %vm827 = vcmp.lt.s32.totalorder %v577, 125
        %v828 = vsel %vm827, %v816, %v822
        %v829 = vsel %vm827, %v818, %v824
        %v830 = vsel %vm827, %v820, %v826
        %v831 = vsel %vm827, %v822, %v816
        %v832 = vsel %vm827, %v824, %v818
        %v833 = vsel %vm827, %v826, %v820
        %v834 = vlaneseq
        %v835 = vshrl.u32 %v834, 7
        %v836 = vsub.s32 5, %v835
        %v837 = vrot.slane %v560, %v836
        %v838 = vlaneseq
        %v839 = vshrl.u32 %v838, 7
        %v840 = vsub.s32 5, %v839
        %v841 = vrot.slane %v561, %v840
        %v842 = vmul.f32 %v828, %v837
        %v843 = vmul.f32 %v831, %v841
        %v844 = vmul.f32 %v829, %v837
        %v845 = vmul.f32 %v832, %v841
        %v846 = vmul.f32 %v830, %v837
        %v847 = vmul.f32 %v833, %v841
        %848 = vset.pattern.permute.xlu0 5
        %849 = vperm.xlu0 %848, %v557
        %v850 = vpop.permute.xlu0 %849
        %852 = vset.pattern.permute.xlu0 5
        %853 = vperm.xlu0 %852, %v558
        %v854 = vpop.permute.xlu0 %853
        %856 = vset.pattern.permute.xlu0 5
        %857 = vperm.xlu0 %856, %v559
        %v858 = vpop.permute.xlu0 %857
        %v860 = vmul.f32 %v842, %v850
        %v861 = vmul.f32 %v843, %v850
        %v862 = vmul.f32 %v844, %v854
        %v863 = vmul.f32 %v845, %v854
        %v864 = vmul.f32 %v846, %v858
        %v865 = vmul.f32 %v847, %v858
        %v866 = vadd.f32 %v809, %v860
        %v867 = vadd.f32 %v810, %v861
        %v868 = vadd.f32 %v811, %v862
        %v869 = vadd.f32 %v812, %v863
        %v870 = vadd.f32 %v813, %v864
        %v871 = vadd.f32 %v814, %v865
        %872 = vrot.lane.b32.xlu0 %v866, 32
        %v873 = vpop.permute.xlu0 %872
        %874 = vrot.lane.b32.xlu0 %v868, 32
        %v875 = vpop.permute.xlu0 %874
        %876 = vrot.lane.b32.xlu0 %v870, 32
        %v877 = vpop.permute.xlu0 %876
        %878 = vrot.lane.b32.xlu0 %v867, 32
        %v879 = vpop.permute.xlu0 %878
        %880 = vrot.lane.b32.xlu0 %v869, 32
        %v881 = vpop.permute.xlu0 %880
        %882 = vrot.lane.b32.xlu0 %v871, 32
        %v883 = vpop.permute.xlu0 %882
        %vm884 = vcmp.lt.s32.totalorder %v577, 32
        %v885 = vsel %vm884, %v873, %v879
        %v886 = vsel %vm884, %v875, %v881
        %v887 = vsel %vm884, %v877, %v883
        %v888 = vsel %vm884, %v879, %v873
        %v889 = vsel %vm884, %v881, %v875
        %v890 = vsel %vm884, %v883, %v877
        %v891 = vlaneseq
        %v892 = vshrl.u32 %v891, 7
        %v893 = vsub.s32 6, %v892
        %v894 = vrot.slane %v560, %v893
        %v895 = vlaneseq
        %v896 = vshrl.u32 %v895, 7
        %v897 = vsub.s32 6, %v896
        %v898 = vrot.slane %v561, %v897
        %v899 = vmul.f32 %v888, %v894
        %v900 = vmul.f32 %v885, %v898
        %v901 = vmul.f32 %v889, %v894
        %v902 = vmul.f32 %v886, %v898
        %v903 = vmul.f32 %v890, %v894
        %v904 = vmul.f32 %v887, %v898
        %905 = vset.pattern.permute.xlu0 6
        %906 = vperm.xlu0 %905, %v557
        %v907 = vpop.permute.xlu0 %906
        %909 = vset.pattern.permute.xlu0 6
        %910 = vperm.xlu0 %909, %v558
        %v911 = vpop.permute.xlu0 %910
        %913 = vset.pattern.permute.xlu0 6
        %914 = vperm.xlu0 %913, %v559
        %v915 = vpop.permute.xlu0 %914
        %v917 = vmul.f32 %v899, %v907
        %v918 = vmul.f32 %v900, %v907
        %v919 = vmul.f32 %v901, %v911
        %v920 = vmul.f32 %v902, %v911
        %v921 = vmul.f32 %v903, %v915
        %v922 = vmul.f32 %v904, %v915
        %923 = vrot.lane.b32.xlu0 %v866, 16
        %v924 = vpop.permute.xlu0 %923
        %925 = vrot.lane.b32.xlu0 %v868, 16
        %v926 = vpop.permute.xlu0 %925
        %927 = vrot.lane.b32.xlu0 %v870, 16
        %v928 = vpop.permute.xlu0 %927
        %929 = vrot.lane.b32.xlu0 %v867, 16
        %v930 = vpop.permute.xlu0 %929
        %931 = vrot.lane.b32.xlu0 %v869, 16
        %v932 = vpop.permute.xlu0 %931
        %933 = vrot.lane.b32.xlu0 %v871, 16
        %v934 = vpop.permute.xlu0 %933
        %vm935 = vcmp.lt.s32.totalorder %v577, 16
        %v936 = vsel %vm935, %v924, %v930
        %v937 = vsel %vm935, %v926, %v932
        %v938 = vsel %vm935, %v928, %v934
        %v939 = vsel %vm935, %v930, %v924
        %v940 = vsel %vm935, %v932, %v926
        %v941 = vsel %vm935, %v934, %v928
        %v942 = vlaneseq
        %v943 = vshrl.u32 %v942, 7
        %v944 = vsub.s32 7, %v943
        %v945 = vrot.slane %v560, %v944
        %v946 = vlaneseq
        %v947 = vshrl.u32 %v946, 7
        %v948 = vsub.s32 7, %v947
        %v949 = vrot.slane %v561, %v948
        %v950 = vmul.f32 %v939, %v945
        %v951 = vmul.f32 %v936, %v949
        %v952 = vmul.f32 %v940, %v945
        %v953 = vmul.f32 %v937, %v949
        %v954 = vmul.f32 %v941, %v945
        %v955 = vmul.f32 %v938, %v949
        %956 = vset.pattern.permute.xlu0 7
        %957 = vperm.xlu0 %956, %v557
        %v958 = vpop.permute.xlu0 %957
        %960 = vset.pattern.permute.xlu0 7
        %961 = vperm.xlu0 %960, %v558
        %v962 = vpop.permute.xlu0 %961
        %964 = vset.pattern.permute.xlu0 7
        %965 = vperm.xlu0 %964, %v559
        %v966 = vpop.permute.xlu0 %965
        %v968 = vmul.f32 %v950, %v958
        %v969 = vmul.f32 %v951, %v958
        %v970 = vmul.f32 %v952, %v962
        %v971 = vmul.f32 %v953, %v962
        %v972 = vmul.f32 %v954, %v966
        %v973 = vmul.f32 %v955, %v966
        %v974 = vadd.f32 %v917, %v968
        %v975 = vadd.f32 %v918, %v969
        %v976 = vadd.f32 %v919, %v970
        %v977 = vadd.f32 %v920, %v971
        %v978 = vadd.f32 %v921, %v972
        %v979 = vadd.f32 %v922, %v973
        %980 = vset.pattern.permute.xlu0 8
        %981 = vperm.xlu0 %980, %v557
        %v982 = vpop.permute.xlu0 %981
        %984 = vset.pattern.permute.xlu0 8
        %985 = vperm.xlu0 %984, %v558
        %v986 = vpop.permute.xlu0 %985
        %988 = vset.pattern.permute.xlu0 8
        %989 = vperm.xlu0 %988, %v559
        %v990 = vpop.permute.xlu0 %989
        %v992 = vmul.f32 %v866, %v982
        %v993 = vmul.f32 %v867, %v982
        %v994 = vmul.f32 %v868, %v986
        %v995 = vmul.f32 %v869, %v986
        %v996 = vmul.f32 %v870, %v990
        %v997 = vmul.f32 %v871, %v990
        %v998 = vadd.f32 %v974, %v992
        %v999 = vadd.f32 %v975, %v993
        %v1000 = vadd.f32 %v976, %v994
        %v1001 = vadd.f32 %v977, %v995
        %v1002 = vadd.f32 %v978, %v996
        %v1003 = vadd.f32 %v979, %v997
        %1004 = vrot.lane.b32.xlu0 %v866, 112
        %v1005 = vpop.permute.xlu0 %1004
        %1006 = vrot.lane.b32.xlu0 %v868, 112
        %v1007 = vpop.permute.xlu0 %1006
        %1008 = vrot.lane.b32.xlu0 %v870, 112
        %v1009 = vpop.permute.xlu0 %1008
        %1010 = vrot.lane.b32.xlu0 %v867, 112
        %v1011 = vpop.permute.xlu0 %1010
        %1012 = vrot.lane.b32.xlu0 %v869, 112
        %v1013 = vpop.permute.xlu0 %1012
        %1014 = vrot.lane.b32.xlu0 %v871, 112
        %v1015 = vpop.permute.xlu0 %1014
        %vm1016 = vcmp.lt.s32.totalorder %v577, 112
        %v1017 = vsel %vm1016, %v1005, %v1011
        %v1018 = vsel %vm1016, %v1007, %v1013
        %v1019 = vsel %vm1016, %v1009, %v1015
        %v1020 = vsel %vm1016, %v1011, %v1005
        %v1021 = vsel %vm1016, %v1013, %v1007
        %v1022 = vsel %vm1016, %v1015, %v1009
        %v1023 = vlaneseq
        %v1024 = vshrl.u32 %v1023, 7
        %v1025 = vsub.s32 1, %v1024
        %v1026 = vrot.slane %v562, %v1025
        %v1027 = vlaneseq
        %v1028 = vshrl.u32 %v1027, 7
        %v1029 = vsub.s32 1, %v1028
        %v1030 = vrot.slane %v563, %v1029
        %v1031 = vmul.f32 %v1017, %v1026
        %v1032 = vmul.f32 %v1020, %v1030
        %v1033 = vmul.f32 %v1018, %v1026
        %v1034 = vmul.f32 %v1021, %v1030
        %v1035 = vmul.f32 %v1019, %v1026
        %v1036 = vmul.f32 %v1022, %v1030
        %1037 = vset.pattern.permute.xlu0 9
        %1038 = vperm.xlu0 %1037, %v557
        %v1039 = vpop.permute.xlu0 %1038
        %1041 = vset.pattern.permute.xlu0 9
        %1042 = vperm.xlu0 %1041, %v558
        %v1043 = vpop.permute.xlu0 %1042
        %1045 = vset.pattern.permute.xlu0 9
        %1046 = vperm.xlu0 %1045, %v559
        %v1047 = vpop.permute.xlu0 %1046
        %v1049 = vmul.f32 %v1031, %v1039
        %v1050 = vmul.f32 %v1032, %v1039
        %v1051 = vmul.f32 %v1033, %v1043
        %v1052 = vmul.f32 %v1034, %v1043
        %v1053 = vmul.f32 %v1035, %v1047
        %v1054 = vmul.f32 %v1036, %v1047
        %v1055 = vadd.f32 %v998, %v1049
        %v1056 = vadd.f32 %v999, %v1050
        %v1057 = vadd.f32 %v1000, %v1051
        %v1058 = vadd.f32 %v1001, %v1052
        %v1059 = vadd.f32 %v1002, %v1053
        %v1060 = vadd.f32 %v1003, %v1054
        %1061 = vrot.lane.b32.xlu0 %v866, 96
        %v1062 = vpop.permute.xlu0 %1061
        %1063 = vrot.lane.b32.xlu0 %v868, 96
        %v1064 = vpop.permute.xlu0 %1063
        %1065 = vrot.lane.b32.xlu0 %v870, 96
        %v1066 = vpop.permute.xlu0 %1065
        %1067 = vrot.lane.b32.xlu0 %v867, 96
        %v1068 = vpop.permute.xlu0 %1067
        %1069 = vrot.lane.b32.xlu0 %v869, 96
        %v1070 = vpop.permute.xlu0 %1069
        %1071 = vrot.lane.b32.xlu0 %v871, 96
        %v1072 = vpop.permute.xlu0 %1071
        %vm1073 = vcmp.lt.s32.totalorder %v577, 96
        %v1074 = vsel %vm1073, %v1062, %v1068
        %v1075 = vsel %vm1073, %v1064, %v1070
        %v1076 = vsel %vm1073, %v1066, %v1072
        %v1077 = vsel %vm1073, %v1068, %v1062
        %v1078 = vsel %vm1073, %v1070, %v1064
        %v1079 = vsel %vm1073, %v1072, %v1066
        %v1080 = vlaneseq
        %v1081 = vshrl.u32 %v1080, 7
        %v1082 = vsub.s32 2, %v1081
        %v1083 = vrot.slane %v562, %v1082
        %v1084 = vlaneseq
        %v1085 = vshrl.u32 %v1084, 7
        %v1086 = vsub.s32 2, %v1085
        %v1087 = vrot.slane %v563, %v1086
        %v1088 = vmul.f32 %v1074, %v1083
        %v1089 = vmul.f32 %v1077, %v1087
        %v1090 = vmul.f32 %v1075, %v1083
        %v1091 = vmul.f32 %v1078, %v1087
        %v1092 = vmul.f32 %v1076, %v1083
        %v1093 = vmul.f32 %v1079, %v1087
        %1094 = vset.pattern.permute.xlu0 10
        %1095 = vperm.xlu0 %1094, %v557
        %v1096 = vpop.permute.xlu0 %1095
        %1098 = vset.pattern.permute.xlu0 10
        %1099 = vperm.xlu0 %1098, %v558
        %v1100 = vpop.permute.xlu0 %1099
        %1102 = vset.pattern.permute.xlu0 10
        %1103 = vperm.xlu0 %1102, %v559
        %v1104 = vpop.permute.xlu0 %1103
        %v1106 = vmul.f32 %v1088, %v1096
        %v1107 = vmul.f32 %v1089, %v1096
        %v1108 = vmul.f32 %v1090, %v1100
        %v1109 = vmul.f32 %v1091, %v1100
        %v1110 = vmul.f32 %v1092, %v1104
        %v1111 = vmul.f32 %v1093, %v1104
        %v1112 = vadd.f32 %v1055, %v1106
        %v1113 = vadd.f32 %v1056, %v1107
        %v1114 = vadd.f32 %v1057, %v1108
        %v1115 = vadd.f32 %v1058, %v1109
        %v1116 = vadd.f32 %v1059, %v1110
        %v1117 = vadd.f32 %v1060, %v1111
        %1118 = vrot.lane.b32.xlu0 %v866, 80
        %v1119 = vpop.permute.xlu0 %1118
        %1120 = vrot.lane.b32.xlu0 %v868, 80
        %v1121 = vpop.permute.xlu0 %1120
        %1122 = vrot.lane.b32.xlu0 %v870, 80
        %v1123 = vpop.permute.xlu0 %1122
        %1124 = vrot.lane.b32.xlu0 %v867, 80
        %v1125 = vpop.permute.xlu0 %1124
        %1126 = vrot.lane.b32.xlu0 %v869, 80
        %v1127 = vpop.permute.xlu0 %1126
        %1128 = vrot.lane.b32.xlu0 %v871, 80
        %v1129 = vpop.permute.xlu0 %1128
        %vm1130 = vcmp.lt.s32.totalorder %v577, 80
        %v1131 = vsel %vm1130, %v1119, %v1125
        %v1132 = vsel %vm1130, %v1121, %v1127
        %v1133 = vsel %vm1130, %v1123, %v1129
        %v1134 = vsel %vm1130, %v1125, %v1119
        %v1135 = vsel %vm1130, %v1127, %v1121
        %v1136 = vsel %vm1130, %v1129, %v1123
        %v1137 = vlaneseq
        %v1138 = vshrl.u32 %v1137, 7
        %v1139 = vsub.s32 3, %v1138
        %v1140 = vrot.slane %v562, %v1139
        %v1141 = vlaneseq
        %v1142 = vshrl.u32 %v1141, 7
        %v1143 = vsub.s32 3, %v1142
        %v1144 = vrot.slane %v563, %v1143
        %v1145 = vmul.f32 %v1131, %v1140
        %v1146 = vmul.f32 %v1134, %v1144
        %v1147 = vmul.f32 %v1132, %v1140
        %v1148 = vmul.f32 %v1135, %v1144
        %v1149 = vmul.f32 %v1133, %v1140
        %v1150 = vmul.f32 %v1136, %v1144
        %1151 = vset.pattern.permute.xlu0 11
        %1152 = vperm.xlu0 %1151, %v557
        %v1153 = vpop.permute.xlu0 %1152
        %1155 = vset.pattern.permute.xlu0 11
        %1156 = vperm.xlu0 %1155, %v558
        %v1157 = vpop.permute.xlu0 %1156
        %1159 = vset.pattern.permute.xlu0 11
        %1160 = vperm.xlu0 %1159, %v559
        %v1161 = vpop.permute.xlu0 %1160
        %v1163 = vmul.f32 %v1145, %v1153
        %v1164 = vmul.f32 %v1146, %v1153
        %v1165 = vmul.f32 %v1147, %v1157
        %v1166 = vmul.f32 %v1148, %v1157
        %v1167 = vmul.f32 %v1149, %v1161
        %v1168 = vmul.f32 %v1150, %v1161
        %v1169 = vadd.f32 %v1112, %v1163
        %v1170 = vadd.f32 %v1113, %v1164
        %v1171 = vadd.f32 %v1114, %v1165
        %v1172 = vadd.f32 %v1115, %v1166
        %v1173 = vadd.f32 %v1116, %v1167
        %v1174 = vadd.f32 %v1117, %v1168
        %v1175 = vld [vmem:[%s4] sm:$0xff]
        %v1176 = vld [vmem:[%s4 + $0x8] sm:$0xff]
        %v1177 = vld [vmem:[%s4 + $0x10] sm:$0xff]
        %1179 = vset.pattern.permute.xlu0 0
        %1180 = vperm.xlu0 %1179, %v1175
        %v1181 = vpop.permute.xlu0 %1180
        %1184 = vset.pattern.permute.xlu0 0
        %1185 = vperm.xlu0 %1184, %v1176
        %v1186 = vpop.permute.xlu0 %1185
        %1189 = vset.pattern.permute.xlu0 0
        %1190 = vperm.xlu0 %1189, %v1177
        %v1191 = vpop.permute.xlu0 %1190
        %v1193 = vadd.f32 %v1169, %v1181
        %v1194 = vadd.f32 %v1170, %v1181
        %v1195 = vadd.f32 %v1171, %v1186
        %v1196 = vadd.f32 %v1172, %v1186
        %v1197 = vadd.f32 %v1173, %v1191
        %v1198 = vadd.f32 %v1174, %v1191
        %v1199 = vsub.f32 0.0, %v1193
        %v1200 = vsub.f32 0.0, %v1194
        %v1201 = vsub.f32 0.0, %v1195
        %v1202 = vsub.f32 0.0, %v1196
        %v1203 = vsub.f32 0.0, %v1197
        %v1204 = vsub.f32 0.0, %v1198
        %v1205 = vmul.f32 %v1199, 1.442695
        %v1206 = vpow.pop %v1205
        %v1207 = vmul.f32 %v1200, 1.442695
        %v1208 = vpow.pop %v1207
        %v1209 = vmul.f32 %v1201, 1.442695
        %v1210 = vpow.pop %v1209
        %v1211 = vmul.f32 %v1202, 1.442695
        %v1212 = vpow.pop %v1211
        %v1213 = vmul.f32 %v1203, 1.442695
        %v1214 = vpow.pop %v1213
        %v1215 = vmul.f32 %v1204, 1.442695
        %v1216 = vpow.pop %v1215
        %v1217 = vadd.f32 %v1206, 1.0
        %v1218 = vadd.f32 %v1208, 1.0
        %v1219 = vadd.f32 %v1210, 1.0
        %v1220 = vadd.f32 %v1212, 1.0
        %v1221 = vadd.f32 %v1214, 1.0
        %v1222 = vadd.f32 %v1216, 1.0
        %v1223 = vrcp.pop %v1217
        %v1224 = vmul.f32 1.0, %v1223
        %v1225 = vrcp.pop %v1218
        %v1226 = vmul.f32 1.0, %v1225
        %v1227 = vrcp.pop %v1219
        %v1228 = vmul.f32 1.0, %v1227
        %v1229 = vrcp.pop %v1220
        %v1230 = vmul.f32 1.0, %v1229
        %v1231 = vrcp.pop %v1221
        %v1232 = vmul.f32 1.0, %v1231
        %v1233 = vrcp.pop %v1222
        %v1234 = vmul.f32 1.0, %v1233
        %v1235 = vmul.f32 %v1193, %v1224
        %v1236 = vmul.f32 %v1194, %v1226
        %v1237 = vmul.f32 %v1195, %v1228
        %v1238 = vmul.f32 %v1196, %v1230
        %v1239 = vmul.f32 %v1197, %v1232
        %v1240 = vmul.f32 %v1198, %v1234
        %v1241 = vld [vmem:[%s5] sm:$0xff]
        %v1242 = vld [vmem:[%s5 + $0x8] sm:$0xff]
        %v1243 = vld [vmem:[%s5 + $0x10] sm:$0xff]
        %v1244 = vld [vmem:[%s5 + $0x18] sm:$0xff]
        %v1245 = vld [vmem:[%s5 + $0x20] sm:$0xff]
        %v1246 = vld [vmem:[%s5 + $0x28] sm:$0xff]
        %v1247 = vld [vmem:[%s5 + $0x30] sm:$0xff]
        %v1248 = vld [vmem:[%s5 + $0x38] sm:$0xff]
        %v1249 = vld [vmem:[%s5 + $0x40] sm:$0xff]
        %v1250 = vld [vmem:[%s5 + $0x48] sm:$0xff]
        %v1251 = vld [vmem:[%s5 + $0x50] sm:$0xff]
        %v1252 = vld [vmem:[%s5 + $0x58] sm:$0xff]
        %v1253 = vld [vmem:[%s5 + $0x60] sm:$0xff]
        %v1254 = vld [vmem:[%s5 + $0x68] sm:$0xff]
        %v1255 = vld [vmem:[%s5 + $0x70] sm:$0xff]
        %v1256 = vld [vmem:[%s5 + $0x78] sm:$0xff]
        %v1257 = vld [vmem:[%s5 + $0x80] sm:$0xff]
        %v1258 = vld [vmem:[%s5 + $0x88] sm:$0xff]
        %v1259 = vld [vmem:[%s5 + $0x90] sm:$0xff]
        %v1260 = vld [vmem:[%s5 + $0x98] sm:$0xff]
        %v1261 = vld [vmem:[%s5 + $0xa0] sm:$0xff]
        %v1262 = vld [vmem:[%s5 + $0xa8] sm:$0xff]
        %v1263 = vld [vmem:[%s5 + $0xb0] sm:$0xff]
        %v1264 = vld [vmem:[%s5 + $0xb8] sm:$0xff]
        %v1265 = vld [vmem:[%s5 + $0xc0] sm:$0xff]
        %v1266 = vld [vmem:[%s5 + $0xc8] sm:$0xff]
        %v1267 = vld [vmem:[%s5 + $0xd0] sm:$0xff]
        %v1268 = vld [vmem:[%s5 + $0xd8] sm:$0xff]
        %v1269 = vld [vmem:[%s5 + $0xe0] sm:$0xff]
        %v1270 = vld [vmem:[%s5 + $0xe8] sm:$0xff]
        %v1271 = vld [vmem:[%s5 + $0xf0] sm:$0xff]
        %v1272 = vld [vmem:[%s5 + $0xf8] sm:$0xff]
        %1273 = vmatprep.subr.mxu0 0.0
        %1274 = vmatpush1.msra.mxu0 %v1241
        %1275 = vmatprep.subr.mxu0 0.0
        %1276 = vmatpush1.msra.mxu0 %v1242
        %1277 = vmatprep.subr.mxu0 0.0
        %1278 = vmatpush1.msra.mxu0 %v1243
        %1279 = vmatprep.subr.mxu0 0.0
        %1280 = vmatpush1.msra.mxu0 %v1244
        %1281 = vmatprep.subr.mxu0 0.0
        %1282 = vmatpush1.msra.mxu0 %v1245
        %1283 = vmatprep.subr.mxu0 0.0
        %1284 = vmatpush1.msra.mxu0 %v1246
        %1285 = vmatprep.subr.mxu0 0.0
        %1286 = vmatpush1.msra.mxu0 %v1247
        %1287 = vmatprep.subr.mxu0 0.0
        %1288 = vmatpush1.msra.mxu0 %v1248
        %1289 = vmatprep.subr.mxu0 0.0
        %1290 = vmatpush1.msra.mxu0 %v1249
        %1291 = vmatprep.subr.mxu0 0.0
        %1292 = vmatpush1.msra.mxu0 %v1250
        %1293 = vmatprep.subr.mxu0 0.0
        %1294 = vmatpush1.msra.mxu0 %v1251
        %1295 = vmatprep.subr.mxu0 0.0
        %1296 = vmatpush1.msra.mxu0 %v1252
        %1297 = vmatprep.subr.mxu0 0.0
        %1298 = vmatpush1.msra.mxu0 %v1253
        %1299 = vmatprep.subr.mxu0 0.0
        %1300 = vmatpush1.msra.mxu0 %v1254
        %1301 = vmatprep.subr.mxu0 0.0
        %1302 = vmatpush1.msra.mxu0 %v1255
        %1303 = vmatprep.subr.mxu0 0.0
        %1304 = vmatpush1.msra.mxu0 %v1256
        %1305 = vmatprep.subr.mxu0 0.0
        %1306 = vmatpush1.msra.mxu0 %v1257
        %1307 = vmatprep.subr.mxu0 0.0
        %1308 = vmatpush1.msra.mxu0 %v1258
        %1309 = vmatprep.subr.mxu0 0.0
        %1310 = vmatpush1.msra.mxu0 %v1259
        %1311 = vmatprep.subr.mxu0 0.0
        %1312 = vmatpush1.msra.mxu0 %v1260
        %1313 = vmatprep.subr.mxu0 0.0
        %1314 = vmatpush1.msra.mxu0 %v1261
        %1315 = vmatprep.subr.mxu0 0.0
        %1316 = vmatpush1.msra.mxu0 %v1262
        %1317 = vmatprep.subr.mxu0 0.0
        %1318 = vmatpush1.msra.mxu0 %v1263
        %1319 = vmatprep.subr.mxu0 0.0
        %1320 = vmatpush1.msra.mxu0 %v1264
        %1321 = vmatprep.subr.mxu0 0.0
        %1322 = vmatpush1.msra.mxu0 %v1265
        %1323 = vmatprep.subr.mxu0 0.0
        %1324 = vmatpush1.msra.mxu0 %v1266
        %1325 = vmatprep.subr.mxu0 0.0
        %1326 = vmatpush1.msra.mxu0 %v1267
        %1327 = vmatprep.subr.mxu0 0.0
        %1328 = vmatpush1.msra.mxu0 %v1268
        %1329 = vmatprep.subr.mxu0 0.0
        %1330 = vmatpush1.msra.mxu0 %v1269
        %1331 = vmatprep.subr.mxu0 0.0
        %1332 = vmatpush1.msra.mxu0 %v1270
        %1333 = vmatprep.subr.mxu0 0.0
        %1334 = vmatpush1.msra.mxu0 %v1271
        %1335 = vmatprep.subr.mxu0 0.0
        %1336 = vmatpush1.msra.mxu0 %v1272
        %1337 = vmatprep.mubr.f32.mxu0 %v1236
        %1338 = vmatmul.mubr.f32.gmra.mrb[0].mxu0 %v1235
        %v1339 = vpop.f32.mrb[0].mxu0
        %v1340 = vadd.f32 0.0, %v1339
        %v1341 = vpop.f32.mrb[0].mxu0
        %1342 = vmatprep.mubr.f32.mxu0 %v1238
        %1343 = vmatmul.mubr.f32.gmra.mrb[0].mxu0 %v1237
        %v1344 = vpop.f32.mrb[0].mxu0
        %v1345 = vadd.f32 0.0, %v1344
        %v1346 = vpop.f32.mrb[0].mxu0
        %1347 = vmatprep.mubr.f32.mxu0 %v1240
        %1348 = vmatmul.mubr.f32.gmra.mrb[0].mxu0 %v1239
        %v1349 = vpop.f32.mrb[0].mxu0
        %v1350 = vadd.f32 0.0, %v1349
        %v1351 = vpop.f32.mrb[0].mxu0
        %1352 = vdwg.mxu0
        %v1353 = vld [vmem:[%s6] sm:$0x1]
        %v1354 = vld [vmem:[#allocation2] sm:$0x1]
        %1356 = vset.pattern.permute.xlu0 0
        %1357 = vperm.xlu0 %1356, %v1354
        %v1358 = vpop.permute.xlu0 %1357
        %v1360 = vlaneseq
        %v1361 = vshrl.u32 %v1360, 7
        %v1362 = vsub.s32 0, %v1361
        %v1363 = vrot.slane %v1358, %v1362
        %vm1364 = vcmask 195584
        %v1366 = vsel %vm1364, %v1353, 0
        %1368 = vmatprep.subr.mxu0 0.0
        %1369 = vmatpush1.msra.mxu0 %v1340
        %1370 = vmatprep.subr.mxu0 0.0
        %1371 = vmatpush1.msra.mxu0 %v1345
        %1372 = vmatprep.subr.mxu0 0.0
        %1373 = vmatpush1.msra.mxu0 %v1350
        %1374 = vmatprep.subr.mxu0 0.0
        %1375 = vmatpush1.msra.mxu0 0.0
        %1376 = vmatprep.subr.mxu0 0.0
        %1377 = vmatpush1.msra.mxu0 0.0
        %1378 = vmatprep.subr.mxu0 0.0
        %1379 = vmatpush1.msra.mxu0 0.0
        %1380 = vmatprep.subr.mxu0 0.0
        %1381 = vmatpush1.msra.mxu0 0.0
        %1382 = vmatprep.subr.mxu0 0.0
        %1383 = vmatpush1.msra.mxu0 0.0
        %1384 = vmatprep.subr.mxu0 0.0
        %1385 = vmatpush1.msra.mxu0 0.0
        %1386 = vmatprep.subr.mxu0 0.0
        %1387 = vmatpush1.msra.mxu0 0.0
        %1388 = vmatprep.subr.mxu0 0.0
        %1389 = vmatpush1.msra.mxu0 0.0
        %1390 = vmatprep.subr.mxu0 0.0
        %1391 = vmatpush1.msra.mxu0 0.0
        %1392 = vmatprep.subr.mxu0 0.0
        %1393 = vmatpush1.msra.mxu0 0.0
        %1394 = vmatprep.subr.mxu0 0.0
        %1395 = vmatpush1.msra.mxu0 0.0
        %1396 = vmatprep.subr.mxu0 0.0
        %1397 = vmatpush1.msra.mxu0 0.0
        %1398 = vmatprep.subr.mxu0 0.0
        %1399 = vmatpush1.msra.mxu0 0.0
        %1400 = vmatprep.subr.mxu0 0.0
        %1401 = vmatpush1.msra.mxu0 0.0
        %1402 = vmatprep.subr.mxu0 0.0
        %1403 = vmatpush1.msra.mxu0 0.0
        %1404 = vmatprep.subr.mxu0 0.0
        %1405 = vmatpush1.msra.mxu0 0.0
        %1406 = vmatprep.subr.mxu0 0.0
        %1407 = vmatpush1.msra.mxu0 0.0
        %1408 = vmatprep.subr.mxu0 0.0
        %1409 = vmatpush1.msra.mxu0 0.0
        %1410 = vmatprep.subr.mxu0 0.0
        %1411 = vmatpush1.msra.mxu0 0.0
        %1412 = vmatprep.subr.mxu0 0.0
        %1413 = vmatpush1.msra.mxu0 0.0
        %1414 = vmatprep.subr.mxu0 0.0
        %1415 = vmatpush1.msra.mxu0 0.0
        %1416 = vmatprep.subr.mxu0 0.0
        %1417 = vmatpush1.msra.mxu0 0.0
        %1418 = vmatprep.subr.mxu0 0.0
        %1419 = vmatpush1.msra.mxu0 0.0
        %1420 = vmatprep.subr.mxu0 0.0
        %1421 = vmatpush1.msra.mxu0 0.0
        %1422 = vmatprep.subr.mxu0 0.0
        %1423 = vmatpush1.msra.mxu0 0.0
        %1424 = vmatprep.subr.mxu0 0.0
        %1425 = vmatpush1.msra.mxu0 0.0
        %1426 = vmatprep.subr.mxu0 0.0
        %1427 = vmatpush1.msra.mxu0 0.0
        %1428 = vmatprep.subr.mxu0 0.0
        %1429 = vmatpush1.msra.mxu0 0.0
        %1430 = vmatprep.subr.mxu0 0.0
        %1431 = vmatpush1.msra.mxu0 0.0
        %1432 = vmatprep.mubr.f32.mxu0 0.0
        %1433 = vmatmul.mubr.f32.gmra.mrb[0].mxu0 %v1366
        %v1434 = vpop.f32.mrb[0].mxu0
        %v1435 = vadd.f32 %v1363, %v1434
        %v1436 = vpop.f32.mrb[0].mxu0
        %1437 = vdwg.mxu0
        %v1438 = vsub.f32 0.0, %v1435
        %v1439 = vmul.f32 %v1438, 1.442695
        %v1440 = vpow.pop %v1439
        %v1441 = vadd.f32 %v1440, 1.0
        %v1442 = vrcp.pop %v1441
        %v1443 = vmul.f32 1.0, %v1442
        %v1444 = vmul.f32 %v1435, %v1443
        %v1445 = vld [vmem:[%s8] sm:$0xff]
        %v1446 = vld [vmem:[%s8 + $0x8] sm:$0xff]
        %v1447 = vld [vmem:[%s8 + $0x10] sm:$0xff]
        %v1448 = vld [vmem:[%s9] sm:$0xff]
        %v1449 = vld [vmem:[%s9 + $0x8] sm:$0xff]
        %v1450 = vld [vmem:[%s9 + $0x10] sm:$0xff]
        %1452 = vset.pattern.permute.xlu0 0
        %1453 = vperm.xlu0 %1452, %v1448
        %v1454 = vpop.permute.xlu0 %1453
        %1457 = vset.pattern.permute.xlu0 0
        %1458 = vperm.xlu0 %1457, %v1449
        %v1459 = vpop.permute.xlu0 %1458
        %1462 = vset.pattern.permute.xlu0 0
        %1463 = vperm.xlu0 %1462, %v1450
        %v1464 = vpop.permute.xlu0 %1463
        %vm1466 = vcmask 7168
        %v1468 = vsel %vm1466, %v1445, 0
        %v1471 = vsel %vm1466, %v1446, 0
        %v1474 = vsel %vm1466, %v1447, 0
        %vm1476 = vcmask 1040384
        %v1478 = vsel %vm1476, %v1444, 0
        %1480 = vmatprep.subr.mxu0 0.0
        %1481 = vmatpush1.msra.mxu0 %v1478
        %1482 = vmatprep.subr.mxu0 0.0
        %1483 = vmatpush1.msra.mxu0 0.0
        %1484 = vmatprep.subr.mxu0 0.0
        %1485 = vmatpush1.msra.mxu0 0.0
        %1486 = vmatprep.subr.mxu0 0.0
        %1487 = vmatpush1.msra.mxu0 0.0
        %1488 = vmatprep.subr.mxu0 0.0
        %1489 = vmatpush1.msra.mxu0 0.0
        %1490 = vmatprep.subr.mxu0 0.0
        %1491 = vmatpush1.msra.mxu0 0.0
        %1492 = vmatprep.subr.mxu0 0.0
        %1493 = vmatpush1.msra.mxu0 0.0
        %1494 = vmatprep.subr.mxu0 0.0
        %1495 = vmatpush1.msra.mxu0 0.0
        %1496 = vmatprep.subr.mxu0 0.0
        %1497 = vmatpush1.msra.mxu0 0.0
        %1498 = vmatprep.subr.mxu0 0.0
        %1499 = vmatpush1.msra.mxu0 0.0
        %1500 = vmatprep.subr.mxu0 0.0
        %1501 = vmatpush1.msra.mxu0 0.0
        %1502 = vmatprep.subr.mxu0 0.0
        %1503 = vmatpush1.msra.mxu0 0.0
        %1504 = vmatprep.subr.mxu0 0.0
        %1505 = vmatpush1.msra.mxu0 0.0
        %1506 = vmatprep.subr.mxu0 0.0
        %1507 = vmatpush1.msra.mxu0 0.0
        %1508 = vmatprep.subr.mxu0 0.0
        %1509 = vmatpush1.msra.mxu0 0.0
        %1510 = vmatprep.subr.mxu0 0.0
        %1511 = vmatpush1.msra.mxu0 0.0
        %1512 = vmatprep.subr.mxu0 0.0
        %1513 = vmatpush1.msra.mxu0 0.0
        %1514 = vmatprep.subr.mxu0 0.0
        %1515 = vmatpush1.msra.mxu0 0.0
        %1516 = vmatprep.subr.mxu0 0.0
        %1517 = vmatpush1.msra.mxu0 0.0
        %1518 = vmatprep.subr.mxu0 0.0
        %1519 = vmatpush1.msra.mxu0 0.0
        %1520 = vmatprep.subr.mxu0 0.0
        %1521 = vmatpush1.msra.mxu0 0.0
        %1522 = vmatprep.subr.mxu0 0.0
        %1523 = vmatpush1.msra.mxu0 0.0
        %1524 = vmatprep.subr.mxu0 0.0
        %1525 = vmatpush1.msra.mxu0 0.0
        %1526 = vmatprep.subr.mxu0 0.0
        %1527 = vmatpush1.msra.mxu0 0.0
        %1528 = vmatprep.subr.mxu0 0.0
        %1529 = vmatpush1.msra.mxu0 0.0
        %1530 = vmatprep.subr.mxu0 0.0
        %1531 = vmatpush1.msra.mxu0 0.0
        %1532 = vmatprep.subr.mxu0 0.0
        %1533 = vmatpush1.msra.mxu0 0.0
        %1534 = vmatprep.subr.mxu0 0.0
        %1535 = vmatpush1.msra.mxu0 0.0
        %1536 = vmatprep.subr.mxu0 0.0
        %1537 = vmatpush1.msra.mxu0 0.0
        %1538 = vmatprep.subr.mxu0 0.0
        %1539 = vmatpush1.msra.mxu0 0.0
        %1540 = vmatprep.subr.mxu0 0.0
        %1541 = vmatpush1.msra.mxu0 0.0
        %1542 = vmatprep.subr.mxu0 0.0
        %1543 = vmatpush1.msra.mxu0 0.0
        %1544 = vmatprep.mubr.f32.mxu0 0.0
        %1545 = vmatmul.mubr.f32.gmra.mrb[0].mxu0 %v1468
        %v1546 = vpop.f32.mrb[0].mxu0
        %v1547 = vadd.f32 %v1454, %v1546
        %v1548 = vpop.f32.mrb[0].mxu0
        %1549 = vmatprep.mubr.f32.mxu0 0.0
        %1550 = vmatmul.mubr.f32.gmra.mrb[0].mxu0 %v1471
        %v1551 = vpop.f32.mrb[0].mxu0
        %v1552 = vadd.f32 %v1459, %v1551
        %v1553 = vpop.f32.mrb[0].mxu0
        %1554 = vmatprep.mubr.f32.mxu0 0.0
        %1555 = vmatmul.mubr.f32.gmra.mrb[0].mxu0 %v1474
        %v1556 = vpop.f32.mrb[0].mxu0
        %v1557 = vadd.f32 %v1464, %v1556
        %v1558 = vpop.f32.mrb[0].mxu0
        %1559 = vdwg.mxu0
        %v1560 = vsub.f32 0.0, %v1547
        %v1561 = vsub.f32 0.0, %v1552
        %v1562 = vsub.f32 0.0, %v1557
        %v1563 = vmul.f32 %v1560, 1.442695
        %v1564 = vpow.pop %v1563
        %v1565 = vmul.f32 %v1561, 1.442695
        %v1566 = vpow.pop %v1565
        %v1567 = vmul.f32 %v1562, 1.442695
        %v1568 = vpow.pop %v1567
        %v1569 = vadd.f32 %v1564, 1.0
        %v1570 = vadd.f32 %v1566, 1.0
        %v1571 = vadd.f32 %v1568, 1.0
        %v1572 = vrcp.pop %v1569
        %v1573 = vmul.f32 1.0, %v1572
        %v1574 = vrcp.pop %v1570
        %v1575 = vmul.f32 1.0, %v1574
        %v1576 = vrcp.pop %v1571
        %v1577 = vmul.f32 1.0, %v1576
        %v1578 = vld [vmem:[%s10] sm:$0xff]
        %v1580 = vsel %vm1364, %v1578, 0
        %1582 = vmatprep.subr.mxu0 0.0
        %1583 = vmatpush1.msra.mxu0 %v1573
        %1584 = vmatprep.subr.mxu0 0.0
        %1585 = vmatpush1.msra.mxu0 %v1575
        %1586 = vmatprep.subr.mxu0 0.0
        %1587 = vmatpush1.msra.mxu0 %v1577
        %1588 = vmatprep.subr.mxu0 0.0
        %1589 = vmatpush1.msra.mxu0 0.0
        %1590 = vmatprep.subr.mxu0 0.0
        %1591 = vmatpush1.msra.mxu0 0.0
        %1592 = vmatprep.subr.mxu0 0.0
        %1593 = vmatpush1.msra.mxu0 0.0
        %1594 = vmatprep.subr.mxu0 0.0
        %1595 = vmatpush1.msra.mxu0 0.0
        %1596 = vmatprep.subr.mxu0 0.0
        %1597 = vmatpush1.msra.mxu0 0.0
        %1598 = vmatprep.subr.mxu0 0.0
        %1599 = vmatpush1.msra.mxu0 0.0
        %1600 = vmatprep.subr.mxu0 0.0
        %1601 = vmatpush1.msra.mxu0 0.0
        %1602 = vmatprep.subr.mxu0 0.0
        %1603 = vmatpush1.msra.mxu0 0.0
        %1604 = vmatprep.subr.mxu0 0.0
        %1605 = vmatpush1.msra.mxu0 0.0
        %1606 = vmatprep.subr.mxu0 0.0
        %1607 = vmatpush1.msra.mxu0 0.0
        %1608 = vmatprep.subr.mxu0 0.0
        %1609 = vmatpush1.msra.mxu0 0.0
        %1610 = vmatprep.subr.mxu0 0.0
        %1611 = vmatpush1.msra.mxu0 0.0
        %1612 = vmatprep.subr.mxu0 0.0
        %1613 = vmatpush1.msra.mxu0 0.0
        %1614 = vmatprep.subr.mxu0 0.0
        %1615 = vmatpush1.msra.mxu0 0.0
        %1616 = vmatprep.subr.mxu0 0.0
        %1617 = vmatpush1.msra.mxu0 0.0
        %1618 = vmatprep.subr.mxu0 0.0
        %1619 = vmatpush1.msra.mxu0 0.0
        %1620 = vmatprep.subr.mxu0 0.0
        %1621 = vmatpush1.msra.mxu0 0.0
        %1622 = vmatprep.subr.mxu0 0.0
        %1623 = vmatpush1.msra.mxu0 0.0
        %1624 = vmatprep.subr.mxu0 0.0
        %1625 = vmatpush1.msra.mxu0 0.0
        %1626 = vmatprep.subr.mxu0 0.0
        %1627 = vmatpush1.msra.mxu0 0.0
        %1628 = vmatprep.subr.mxu0 0.0
        %1629 = vmatpush1.msra.mxu0 0.0
        %1630 = vmatprep.subr.mxu0 0.0
        %1631 = vmatpush1.msra.mxu0 0.0
        %1632 = vmatprep.subr.mxu0 0.0
        %1633 = vmatpush1.msra.mxu0 0.0
        %1634 = vmatprep.subr.mxu0 0.0
        %1635 = vmatpush1.msra.mxu0 0.0
        %1636 = vmatprep.subr.mxu0 0.0
        %1637 = vmatpush1.msra.mxu0 0.0
        %1638 = vmatprep.subr.mxu0 0.0
        %1639 = vmatpush1.msra.mxu0 0.0
        %1640 = vmatprep.subr.mxu0 0.0
        %1641 = vmatpush1.msra.mxu0 0.0
        %1642 = vmatprep.subr.mxu0 0.0
        %1643 = vmatpush1.msra.mxu0 0.0
        %1644 = vmatprep.subr.mxu0 0.0
        %1645 = vmatpush1.msra.mxu0 0.0
        %1646 = vmatprep.mubr.f32.mxu0 0.0
        %1647 = vmatmul.mubr.f32.gmra.mrb[0].mxu0 %v1580
        %v1648 = vpop.f32.mrb[0].mxu0
        %v1649 = vadd.f32 0.0, %v1648
        %v1650 = vpop.f32.mrb[0].mxu0
        %1651 = vdwg.mxu0
        %vm1652 = vcmask 130048
        %1653 = vst.msk [vmem:[%s381] sm:$0xff] %vm1652, %v1649
        %s1654 = sand.u32 %s271, 1
        %s1655 = scalar_lea.sflag [#allocation4], %s1654
        %s1656 = sand.u32 %s271, 1
        %s1657 = smul.addr %s1656, 8
        %s1658 = scalar_lea.vmem [#allocation3], %s1657
        // Predicated region
        $region65: #{tpu_custom_call.1} parent=63 // pred_check
          %p1659 = pneg %p281
        $region66: #{tpu_custom_call.1} parent=63 // pred_check_branch
          %1661 = sbr.rel (%p1659) target = $region68
        $region67: #{tpu_custom_call.1} parent=63 // pred_region
          %s1663 = ssub.s32 128, 128
          %1664 = vsyncadd %s1655, %s1663
          %s1665 = smul.addr %s27, 128
          %s1666 = scalar_lea.hbm %s11, %s1665
          %s1668 = sshll.u32 %s1658, 4
          %s1669 = int_to_ptr.vmem [resolvable:$true] %s1668
          %1671 = dma.vmem_to_hbm [thread:$0]  %s1669, 128, %s1666, %s1655
        $region68: #{tpu_custom_call.1} parent=63 // pred_fallthru
          _
      $region64: #{tpu_custom_call.1} parent=5 // pred_fallthru
        _
      %p1672 = scmp.le.s32.totalorder 2, %s22
      // Predicated region
      $region69: #{tpu_custom_call.1} parent=5 // pred_check
        %p1673 = pneg %p1672
      $region70: #{tpu_custom_call.1} parent=5 // pred_check_branch
        %1675 = sbr.rel (%p1673) target = $region72
      $region71: #{tpu_custom_call.1} parent=5 // pred_region
        %s1676 = ssub.s32 %s22, 2
        // Predicated region
        $region73: #{tpu_custom_call.1} parent=71 // pred_check
          %p1677 = pneg %p287
        $region74: #{tpu_custom_call.1} parent=71 // pred_check_branch
          %1679 = sbr.rel (%p1677) target = $region76
        $region75: #{tpu_custom_call.1} parent=71 // pred_region
          %s1680 = sand.u32 %s272, 1
          %s1681 = scalar_lea.sflag [#allocation4], %s1680
          %s1682 = sand.u32 %s272, 1
          %s1683 = smul.addr %s1682, 8
          %s1684 = scalar_lea.vmem [#allocation3], %s1683
          %1685 = dma.done %s1681, 128
        $region76: #{tpu_custom_call.1} parent=71 // pred_fallthru
          _
      $region72: #{tpu_custom_call.1} parent=5 // pred_fallthru
        _
    $region6: #{tpu_custom_call.1} parent=1 // loop_footer
      %s26 = sadd.s32 1, %s22
    $region7: #{tpu_custom_call.1} parent=1 // loop_footer_branch
      %21 = sbr.rel target = $region3
    $region8: #{tpu_custom_call.1} parent=1 // loop_exit
      _
    %1686 = vsyncpa [#allocation4], 1
    %s1687 = scalar_lea.sflag [#allocation4], 1
    %1688 = vsyncpa %s1687, 1

</llo_original>
